<compile_context>
chip_gen: v5e
topology: v5e:2x2
jax: 0.10.0
libtpu: 0.0.40
codegen_flags: <defaults>
</compile_context>

<pallas_src>
import functools

import jax
import jax.numpy as jnp
from jax import lax
from jax.experimental import pallas as pl
from jax.experimental.pallas import tpu as pltpu


def _bf16(v):
    return v.astype(jnp.bfloat16)


def _gelu(v):
    # tanh-approx GELU (EUP) — PyTorch nn.GELU() default is exact erf.
    c = 0.7978845608028654  # sqrt(2/pi)
    return 0.5 * v * (1.0 + jnp.tanh(c * (v + 0.044715 * v * v * v)))


def _mix_lane(h, gamma, beta, w1, b1, w2, b2, eps):
    """MixerLayer, mixed axis on lanes. h:(R,C); vectors (1,C); w (C,C) (in,out)."""
    mu = jnp.mean(h, axis=-1, keepdims=True)
    var = jnp.mean(jnp.square(h - mu), axis=-1, keepdims=True)
    ln = (h - mu) * lax.rsqrt(var + eps) * gamma + beta
    d = jnp.dot(_bf16(ln), _bf16(w1), preferred_element_type=jnp.float32) + b1
    d = _gelu(d)
    d = jnp.dot(_bf16(d), _bf16(w2), preferred_element_type=jnp.float32) + b2
    return h + d


def _mix_sublane(h, gamma, beta, w1, b1, w2, b2, eps):
    """MixerLayer, mixed axis on sublanes. h:(C,L); vectors (C,1); w (C,C) (out,in),
    applied as a left matmul so the wide batch-folded axis stays lane-dense."""
    mu = jnp.mean(h, axis=0, keepdims=True)
    var = jnp.mean(jnp.square(h - mu), axis=0, keepdims=True)
    ln = (h - mu) * lax.rsqrt(var + eps) * gamma + beta
    d = jnp.dot(_bf16(w1), _bf16(ln), preferred_element_type=jnp.float32) + b1
    d = _gelu(d)
    d = jnp.dot(_bf16(w2), _bf16(d), preferred_element_type=jnp.float32) + b2
    return h + d


def _mlp_mixer_kernel(x_ref, cp_ref, sp_ref, o_ref,
                      rows_a, slab_t, rows_b, slab_n, rows_c,
                      *, Bb, T, N, H, F, Dout, eps):
    """One grid step = Bb batch elements.

    Row convention: r1 = (b*N + n)*T + t (input/stage-1 rows),
                    r3 = (b*T + t)*N + n (output rows).
    Slabs: slab_t (T, Bb*N*H) lanes (b,n,h); slab_n (N, Bb*T*H) lanes (b,t,h)."""
    # ---- packed parameter views (static slices, big matrices 8-row aligned) --
    w1c = cp_ref[0:H, :]
    w2c = cp_ref[H:2 * H, :]
    we = cp_ref[2 * H:2 * H + F, :]
    wo_t = cp_ref[2 * H + F:2 * H + F + Dout, :]
    vr = 2 * H + F + Dout
    gc = cp_ref[vr + 0:vr + 1, :]
    bc = cp_ref[vr + 1:vr + 2, :]
    b1c = cp_ref[vr + 2:vr + 3, :]
    b2c = cp_ref[vr + 3:vr + 4, :]

    w1t = sp_ref[0:T, 0:T]
    w2t = sp_ref[0:T, T:2 * T]
    gt = sp_ref[0:T, 2 * T + 0:2 * T + 1]
    bt = sp_ref[0:T, 2 * T + 1:2 * T + 2]
    b1t = sp_ref[0:T, 2 * T + 2:2 * T + 3]
    b2t = sp_ref[0:T, 2 * T + 3:2 * T + 4]
    off = 2 * T + 4
    w1n = sp_ref[0:N, off:off + N]
    w2n = sp_ref[0:N, off + N:off + 2 * N]
    gn = sp_ref[0:N, off + 2 * N + 0:off + 2 * N + 1]
    bn = sp_ref[0:N, off + 2 * N + 1:off + 2 * N + 2]
    b1n = sp_ref[0:N, off + 2 * N + 2:off + 2 * N + 3]
    b2n = sp_ref[0:N, off + 2 * N + 3:off + 2 * N + 4]

    # ---- embedding_layer (bias-free): K=F is tiny -> unrolled VPU FMAs -------
    x = x_ref[0]                                    # (Bb*N*T, F)
    if F <= 8:
        h = x[:, 0:1] * we[0:1, :]
        for f in range(1, F):
            h = h + x[:, f:f + 1] * we[f:f + 1, :]
    else:
        h = jnp.dot(x, we, preferred_element_type=jnp.float32)

    # ---- channel mixer: mix over hidden H (lane dim) -------------------------
    rows_a[...] = _mix_lane(h, gc, bc, w1c, b1c, w2c, b2c, eps)

    # ---- relayout rows(b,n,t) -> time slab (T, Bb*N*H): contiguous copies ----
    for j in range(Bb * N):                          # j = b*N + n
        slab_t[:, j * H:(j + 1) * H] = rows_a[j * T:(j + 1) * T, :]

    # ---- time mixer: mix over window T (sublanes), one (T,T)@(T,Bb*N*H) ------
    ht = _mix_sublane(slab_t[...], gt, bt, w1t, b1t, w2t, b2t, eps)

    # ---- relayout back to rows(b,n,t), then gather node slab (N, Bb*T*H) -----
    for j in range(Bb * N):
        rows_b[j * T:(j + 1) * T, :] = ht[:, j * H:(j + 1) * H]
    for b in range(Bb):
        for t in range(T):
            c = (b * T + t) * H
            slab_n[:, c:c + H] = rows_b[pl.ds(b * N * T + t, N, stride=T), :]

    # ---- node mixer: mix over nodes N (sublanes), one (N,N)@(N,Bb*T*H) -------
    hn = _mix_sublane(slab_n[...], gn, bn, w1n, b1n, w2n, b2n, eps)

    # ---- node slab -> rows(b,t,n): contiguous copies --------------------------
    for b in range(Bb):
        for t in range(T):
            r = (b * T + t) * N
            rows_c[r:r + N, :] = hn[:, (b * T + t) * H:(b * T + t + 1) * H]

    # ---- output_layer (bias-free), emitted TRANSPOSED (Dout, Bb*T*N) so the
    # ---- store / HBM writeback is lane-dense instead of 2/128-lane masked ----
    o_ref[0] = jnp.einsum('dh,rh->dr', _bf16(wo_t), _bf16(rows_c[...]),
                          preferred_element_type=jnp.float32)


def build_packs(params, F, Dout, T, N, H):
    """Pack the 21 small parameter arrays into two concatenated arrays."""
    gc, bc, w1c, b1c, w2c, b2c = params["channel"]
    cpack = jnp.concatenate(
        [w1c, w2c, params["We"], params["Wo"].T,
         gc[None, :], bc[None, :], b1c[None, :], b2c[None, :]], axis=0)

    def side(prm):
        g, b, w1, b1, w2, b2 = prm
        # kernel applies left-matmuls, so store (out,in) = W.T
        return jnp.concatenate(
            [w1.T, w2.T, g[:, None], b[:, None], b1[:, None], b2[:, None]], axis=1)

    tcols = side(params["time"])     # (T, 2T+4)
    ncols = side(params["node"])     # (N, 2N+4)
    P = max(T, N)
    tcols = jnp.pad(tcols, ((0, P - T), (0, 0)))
    ncols = jnp.pad(ncols, ((0, P - N), (0, 0)))
    spack = jnp.concatenate([tcols, ncols], axis=1)
    return cpack, spack


def mlp_mixer_forward(x, params, input_dim, output_dim, *, batch_block=8):
    """x: (B, window, num_nodes, features) -> (B, window, num_nodes, output_dim)."""
    B, T, N, _ = x.shape
    H = params["We"].shape[1]
    F, Dout = input_dim, output_dim

    # Batch block: amortize per-grid-step overhead, but keep >= 2 steps for B>=2.
    Bb = max(1, min(batch_block, pl.cdiv(B, 2)))
    G = pl.cdiv(B, Bb)
    Bpad = G * Bb

    xk = x[..., :F].astype(jnp.float32)
    if Bpad != B:
        xk = jnp.concatenate(
            [xk, jnp.zeros((Bpad - B, T, N, F), jnp.float32)], axis=0)
    # kernel row order is (b, n, t)  (node-major within a batch element)
    x_rows = jnp.transpose(xk, (0, 2, 1, 3)).reshape(G, Bb * N * T, F)

    cpack, spack = build_packs(params, F, Dout, T, N, H)

    kernel = functools.partial(_mlp_mixer_kernel, Bb=Bb, T=T, N=N, H=H, F=F,
                               Dout=Dout, eps=1e-5)
    R = Bb * T * N
    out_t = pl.pallas_call(
        kernel,
        out_shape=jax.ShapeDtypeStruct((G, Dout, R), jnp.float32),
        grid=(G,),
        in_specs=[pl.BlockSpec((1, Bb * N * T, F), lambda g: (g, 0, 0)),
                  pl.BlockSpec(cpack.shape, lambda g: (0, 0)),
                  pl.BlockSpec(spack.shape, lambda g: (0, 0))],
        out_specs=pl.BlockSpec((1, Dout, R), lambda g: (g, 0, 0)),
        scratch_shapes=[pltpu.VMEM((Bb * N * T, H), jnp.float32),   # rows_a
                        pltpu.VMEM((T, Bb * N * H), jnp.float32),   # slab_t
                        pltpu.VMEM((Bb * N * T, H), jnp.float32),   # rows_b
                        pltpu.VMEM((N, Bb * T * H), jnp.float32),   # slab_n
                        pltpu.VMEM((Bb * T * N, H), jnp.float32)],  # rows_c
        compiler_params=pltpu.CompilerParams(
            dimension_semantics=("parallel",),
            vmem_limit_bytes=32 * 1024 * 1024),
    )(x_rows, cpack, spack)

    # (G, Dout, Bb*T*N) -> (Bpad, T, N, Dout); per-step lanes are (b,t,n)-ordered
    out = jnp.transpose(out_t, (0, 2, 1)).reshape(Bpad, T, N, Dout)
    return out[:B]


# ---- parameter init (deterministic, synthetic) --------------------------------

def _init_mixer(key, c):
    k1, k2, k3, k4 = jax.random.split(key, 4)
    gamma = jnp.ones((c,), jnp.float32)
    beta = jnp.zeros((c,), jnp.float32)
    w1 = jax.random.normal(k1, (c, c), jnp.float32) * 0.02      # (in, out)
    b1 = jax.random.normal(k2, (c,), jnp.float32) * 0.02
    w2 = jax.random.normal(k3, (c, c), jnp.float32) * 0.02
    b2 = jax.random.normal(k4, (c,), jnp.float32) * 0.02
    return (gamma, beta, w1, b1, w2, b2)


def init_params(key, input_dim, output_dim, window, num_nodes, hidden_dim):
    ks = jax.random.split(key, 5)
    return {
        "We": jax.random.normal(ks[0], (input_dim, hidden_dim), jnp.float32) * 0.02,
        "Wo": jax.random.normal(ks[1], (hidden_dim, output_dim), jnp.float32) * 0.02,
        "channel": _init_mixer(ks[2], hidden_dim),
        "time": _init_mixer(ks[3], window),
        "node": _init_mixer(ks[4], num_nodes),
    }


# ---- pure-JAX reference (PyTorch semantics: f32, exact erf-GELU) ---------------

def _mixer_ref(h, prm, eps=1e-5):
    g, b, w1, b1, w2, b2 = prm
    mu = h.mean(-1, keepdims=True)
    var = jnp.mean(jnp.square(h - mu), -1, keepdims=True)
    ln = (h - mu) / jnp.sqrt(var + eps) * g + b
    d = jax.nn.gelu(ln @ w1 + b1, approximate=False)
    return h + (d @ w2 + b2)


def mlp_mixer_reference(x, params, input_dim):
    h = x[..., :input_dim] @ params["We"]       # (B,T,N,H)
    h = _mixer_ref(h, params["channel"])        # mix H
    h = jnp.transpose(h, (0, 3, 2, 1))          # (B,H,N,T)
    h = _mixer_ref(h, params["time"])           # mix T
    h = jnp.transpose(h, (0, 1, 3, 2))          # (B,H,T,N)
    h = _mixer_ref(h, params["node"])           # mix N
    h = jnp.transpose(h, (0, 2, 3, 1))          # (B,T,N,H)
    return h @ params["Wo"]


if __name__ == "__main__":
    B, window, num_nodes = 2, 8, 4
    feat, input_dim, output_dim, hidden_dim = 4, 3, 2, 32

    key = jax.random.PRNGKey(0)
    kx, kp = jax.random.split(key)
    x = jax.random.normal(kx, (B, window, num_nodes, feat), jnp.float32)
    params = init_params(kp, input_dim, output_dim, window, num_nodes, hidden_dim)

    out = mlp_mixer_forward(x, params, input_dim, output_dim)
    out = jax.block_until_ready(out)
    assert out.shape == (B, window, num_nodes, output_dim), out.shape

    ref = mlp_mixer_reference(x, params, input_dim)
    err = float(jnp.max(jnp.abs(out - ref)))
    # tolerance covers bf16 MXU operands + tanh-GELU approximation
    assert err < 3e-2, f"max abs err {err}"
    print("KERNEL_OK")
</pallas_src>

<mosaic_0001>
module attributes {stable_mosaic.version = 11 : i64} {
  func.func @_mlp_mixer_kernel(%arg0: i32, %arg1: memref<1x32x3xf32, #tpu.memory_space<vmem>>, %arg2: memref<73x32xf32, #tpu.memory_space<vmem>>, %arg3: memref<8x32xf32, #tpu.memory_space<vmem>>, %arg4: memref<1x2x32xf32, #tpu.memory_space<vmem>>, %arg5: memref<32x32xf32, #tpu.memory_space<vmem>>, %arg6: memref<8x128xf32, #tpu.memory_space<vmem>>, %arg7: memref<32x32xf32, #tpu.memory_space<vmem>>, %arg8: memref<4x256xf32, #tpu.memory_space<vmem>>, %arg9: memref<32x32xf32, #tpu.memory_space<vmem>>) attributes {dimension_semantics = [#tpu.dimension_semantics<parallel>], iteration_bounds = array<i64: 2>, scalar_prefetch = 0 : i64, scratch_operands = 5 : i64, tpu.core_type = #tpu.core_type<tc>, window_params = [{transform_indices = @transform_0, window_bounds = array<i64: 1, 32, 3>}, {pipeline_mode = #tpu.pipeline_mode<synchronous>, transform_indices = @transform_1, window_bounds = array<i64: 73, 32>}, {pipeline_mode = #tpu.pipeline_mode<synchronous>, transform_indices = @transform_2, window_bounds = array<i64: 8, 32>}, {transform_indices = @transform_3, window_bounds = array<i64: 1, 2, 32>}]} {
    %c0 = arith.constant 0 : index
    %c0_0 = arith.constant 0 : index
    %0 = vector.load %arg2[%c0, %c0_0] : memref<73x32xf32, #tpu.memory_space<vmem>>, vector<32x32xf32>
    %c32 = arith.constant 32 : index
    %c0_1 = arith.constant 0 : index
    %1 = vector.load %arg2[%c32, %c0_1] : memref<73x32xf32, #tpu.memory_space<vmem>>, vector<32x32xf32>
    %c64 = arith.constant 64 : index
    %c0_2 = arith.constant 0 : index
    %2 = vector.load %arg2[%c64, %c0_2] : memref<73x32xf32, #tpu.memory_space<vmem>>, vector<3x32xf32>
    %c67 = arith.constant 67 : index
    %c0_3 = arith.constant 0 : index
    %3 = vector.load %arg2[%c67, %c0_3] : memref<73x32xf32, #tpu.memory_space<vmem>>, vector<2x32xf32>
    %c69 = arith.constant 69 : index
    %c0_4 = arith.constant 0 : index
    %4 = vector.load %arg2[%c69, %c0_4] : memref<73x32xf32, #tpu.memory_space<vmem>>, vector<1x32xf32>
    %c70 = arith.constant 70 : index
    %c0_5 = arith.constant 0 : index
    %5 = vector.load %arg2[%c70, %c0_5] : memref<73x32xf32, #tpu.memory_space<vmem>>, vector<1x32xf32>
    %c71 = arith.constant 71 : index
    %c0_6 = arith.constant 0 : index
    %6 = vector.load %arg2[%c71, %c0_6] : memref<73x32xf32, #tpu.memory_space<vmem>>, vector<1x32xf32>
    %c72 = arith.constant 72 : index
    %c0_7 = arith.constant 0 : index
    %7 = vector.load %arg2[%c72, %c0_7] : memref<73x32xf32, #tpu.memory_space<vmem>>, vector<1x32xf32>
    %c0_8 = arith.constant 0 : index
    %c0_9 = arith.constant 0 : index
    %8 = vector.load %arg3[%c0_8, %c0_9] : memref<8x32xf32, #tpu.memory_space<vmem>>, vector<8x8xf32>
    %c0_10 = arith.constant 0 : index
    %c8 = arith.constant 8 : index
    %9 = vector.load %arg3[%c0_10, %c8] : memref<8x32xf32, #tpu.memory_space<vmem>>, vector<8x8xf32>
    %c0_11 = arith.constant 0 : index
    %c16 = arith.constant 16 : index
    %10 = vector.load %arg3[%c0_11, %c16] : memref<8x32xf32, #tpu.memory_space<vmem>>, vector<8x1xf32>
    %c0_12 = arith.constant 0 : index
    %c17 = arith.constant 17 : index
    %11 = vector.load %arg3[%c0_12, %c17] : memref<8x32xf32, #tpu.memory_space<vmem>>, vector<8x1xf32>
    %c0_13 = arith.constant 0 : index
    %c18 = arith.constant 18 : index
    %12 = vector.load %arg3[%c0_13, %c18] : memref<8x32xf32, #tpu.memory_space<vmem>>, vector<8x1xf32>
    %c0_14 = arith.constant 0 : index
    %c19 = arith.constant 19 : index
    %13 = vector.load %arg3[%c0_14, %c19] : memref<8x32xf32, #tpu.memory_space<vmem>>, vector<8x1xf32>
    %c0_15 = arith.constant 0 : index
    %c20 = arith.constant 20 : index
    %14 = vector.load %arg3[%c0_15, %c20] : memref<8x32xf32, #tpu.memory_space<vmem>>, vector<4x4xf32>
    %c0_16 = arith.constant 0 : index
    %c24 = arith.constant 24 : index
    %15 = vector.load %arg3[%c0_16, %c24] : memref<8x32xf32, #tpu.memory_space<vmem>>, vector<4x4xf32>
    %c0_17 = arith.constant 0 : index
    %c28 = arith.constant 28 : index
    %16 = vector.load %arg3[%c0_17, %c28] : memref<8x32xf32, #tpu.memory_space<vmem>>, vector<4x1xf32>
    %c0_18 = arith.constant 0 : index
    %c29 = arith.constant 29 : index
    %17 = vector.load %arg3[%c0_18, %c29] : memref<8x32xf32, #tpu.memory_space<vmem>>, vector<4x1xf32>
    %c0_19 = arith.constant 0 : index
    %c30 = arith.constant 30 : index
    %18 = vector.load %arg3[%c0_19, %c30] : memref<8x32xf32, #tpu.memory_space<vmem>>, vector<4x1xf32>
    %c0_20 = arith.constant 0 : index
    %c31 = arith.constant 31 : index
    %19 = vector.load %arg3[%c0_20, %c31] : memref<8x32xf32, #tpu.memory_space<vmem>>, vector<4x1xf32>
    %c0_21 = arith.constant 0 : index
    %c0_22 = arith.constant 0 : index
    %c0_23 = arith.constant 0 : index
    %20 = vector.load %arg1[%c0_21, %c0_22, %c0_23] : memref<1x32x3xf32, #tpu.memory_space<vmem>>, vector<1x32x3xf32>
    %21 = vector.shape_cast %20 : vector<1x32x3xf32> to vector<32x3xf32>
    %22 = vector.extract_strided_slice %21 {offsets = [0, 0], sizes = [32, 1], strides = [1, 1]} : vector<32x3xf32> to vector<32x1xf32>
    %23 = vector.extract_strided_slice %2 {offsets = [0, 0], sizes = [1, 32], strides = [1, 1]} : vector<3x32xf32> to vector<1x32xf32>
    %24 = vector.broadcast %22 : vector<32x1xf32> to vector<32x32xf32>
    %25 = vector.broadcast %23 : vector<1x32xf32> to vector<32x32xf32>
    %26 = arith.mulf %24, %25 : vector<32x32xf32>
    %27 = vector.extract_strided_slice %21 {offsets = [0, 1], sizes = [32, 1], strides = [1, 1]} : vector<32x3xf32> to vector<32x1xf32>
    %28 = vector.extract_strided_slice %2 {offsets = [1, 0], sizes = [1, 32], strides = [1, 1]} : vector<3x32xf32> to vector<1x32xf32>
    %29 = vector.broadcast %27 : vector<32x1xf32> to vector<32x32xf32>
    %30 = vector.broadcast %28 : vector<1x32xf32> to vector<32x32xf32>
    %31 = arith.mulf %29, %30 : vector<32x32xf32>
    %32 = arith.addf %26, %31 : vector<32x32xf32>
    %33 = vector.extract_strided_slice %21 {offsets = [0, 2], sizes = [32, 1], strides = [1, 1]} : vector<32x3xf32> to vector<32x1xf32>
    %34 = vector.extract_strided_slice %2 {offsets = [2, 0], sizes = [1, 32], strides = [1, 1]} : vector<3x32xf32> to vector<1x32xf32>
    %35 = vector.broadcast %33 : vector<32x1xf32> to vector<32x32xf32>
    %36 = vector.broadcast %34 : vector<1x32xf32> to vector<32x32xf32>
    %37 = arith.mulf %35, %36 : vector<32x32xf32>
    %38 = arith.addf %32, %37 : vector<32x32xf32>
    %cst = arith.constant dense<0.000000e+00> : vector<32xf32>
    %39 = vector.multi_reduction <add>, %38, %cst [1] : vector<32x32xf32> to vector<32xf32>
    %40 = vector.shape_cast %39 : vector<32xf32> to vector<32x1xf32>
    %cst_24 = arith.constant 3.200000e+01 : f32
    %41 = vector.broadcast %cst_24 : f32 to vector<32x1xf32>
    %42 = arith.divf %40, %41 : vector<32x1xf32>
    %43 = vector.broadcast %42 : vector<32x1xf32> to vector<32x32xf32>
    %44 = arith.subf %38, %43 : vector<32x32xf32>
    %45 = arith.mulf %44, %44 : vector<32x32xf32>
    %cst_25 = arith.constant dense<0.000000e+00> : vector<32xf32>
    %46 = vector.multi_reduction <add>, %45, %cst_25 [1] : vector<32x32xf32> to vector<32xf32>
    %47 = vector.shape_cast %46 : vector<32xf32> to vector<32x1xf32>
    %cst_26 = arith.constant 3.200000e+01 : f32
    %48 = vector.broadcast %cst_26 : f32 to vector<32x1xf32>
    %49 = arith.divf %47, %48 : vector<32x1xf32>
    %50 = vector.broadcast %42 : vector<32x1xf32> to vector<32x32xf32>
    %51 = arith.subf %38, %50 : vector<32x32xf32>
    %cst_27 = arith.constant 9.99999974E-6 : f32
    %52 = vector.broadcast %cst_27 : f32 to vector<32x1xf32>
    %53 = arith.addf %49, %52 : vector<32x1xf32>
    %54 = math.rsqrt %53 : vector<32x1xf32>
    %55 = vector.broadcast %54 : vector<32x1xf32> to vector<32x32xf32>
    %56 = arith.mulf %51, %55 : vector<32x32xf32>
    %57 = vector.broadcast %4 : vector<1x32xf32> to vector<32x32xf32>
    %58 = arith.mulf %56, %57 : vector<32x32xf32>
    %59 = vector.broadcast %5 : vector<1x32xf32> to vector<32x32xf32>
    %60 = arith.addf %58, %59 : vector<32x32xf32>
    %61 = arith.truncf %60 : vector<32x32xf32> to vector<32x32xbf16>
    %62 = arith.truncf %0 : vector<32x32xf32> to vector<32x32xbf16>
    %cst_28 = arith.constant dense<0.000000e+00> : vector<32x32xf32>
    %63 = tpu.matmul %61, %62, %cst_28 {dimension_numbers = #tpu.dot_dimension_numbers<[1], [0], [0], [1], [0, 0, 1, 1], [], []>} : vector<32x32xbf16>, vector<32x32xbf16>, vector<32x32xf32> -> vector<32x32xf32>
    %64 = vector.broadcast %6 : vector<1x32xf32> to vector<32x32xf32>
    %65 = arith.addf %63, %64 : vector<32x32xf32>
    %cst_29 = arith.constant 5.000000e-01 : f32
    %66 = vector.broadcast %cst_29 : f32 to vector<32x32xf32>
    %67 = arith.mulf %66, %65 : vector<32x32xf32>
    %cst_30 = arith.constant 4.471500e-02 : f32
    %68 = vector.broadcast %cst_30 : f32 to vector<32x32xf32>
    %69 = arith.mulf %68, %65 : vector<32x32xf32>
    %70 = arith.mulf %69, %65 : vector<32x32xf32>
    %71 = arith.mulf %70, %65 : vector<32x32xf32>
    %72 = arith.addf %65, %71 : vector<32x32xf32>
    %cst_31 = arith.constant 0.797884583 : f32
    %73 = vector.broadcast %cst_31 : f32 to vector<32x32xf32>
    %74 = arith.mulf %73, %72 : vector<32x32xf32>
    %75 = math.tanh %74 : vector<32x32xf32>
    %cst_32 = arith.constant 1.000000e+00 : f32
    %76 = vector.broadcast %cst_32 : f32 to vector<32x32xf32>
    %77 = arith.addf %76, %75 : vector<32x32xf32>
    %78 = arith.mulf %67, %77 : vector<32x32xf32>
    %79 = arith.truncf %78 : vector<32x32xf32> to vector<32x32xbf16>
    %80 = arith.truncf %1 : vector<32x32xf32> to vector<32x32xbf16>
    %cst_33 = arith.constant dense<0.000000e+00> : vector<32x32xf32>
    %81 = tpu.matmul %79, %80, %cst_33 {dimension_numbers = #tpu.dot_dimension_numbers<[1], [0], [0], [1], [0, 0, 1, 1], [], []>} : vector<32x32xbf16>, vector<32x32xbf16>, vector<32x32xf32> -> vector<32x32xf32>
    %82 = vector.broadcast %7 : vector<1x32xf32> to vector<32x32xf32>
    %83 = arith.addf %81, %82 : vector<32x32xf32>
    %84 = arith.addf %38, %83 : vector<32x32xf32>
    %c0_34 = arith.constant 0 : index
    %c0_35 = arith.constant 0 : index
    %85 = vector.load %arg5[%c0_34, %c0_35] : memref<32x32xf32, #tpu.memory_space<vmem>>, vector<32x32xf32>
    tpu.vector_store %arg5[%c0_34, %c0_35], %84 {strides = array<i32>} : memref<32x32xf32, #tpu.memory_space<vmem>>, vector<32x32xf32>,
    %c0_36 = arith.constant 0 : index
    %c0_37 = arith.constant 0 : index
    %86 = vector.load %arg5[%c0_36, %c0_37] : memref<32x32xf32, #tpu.memory_space<vmem>>, vector<8x32xf32>
    %c0_38 = arith.constant 0 : index
    %c0_39 = arith.constant 0 : index
    %87 = vector.load %arg6[%c0_38, %c0_39] : memref<8x128xf32, #tpu.memory_space<vmem>>, vector<8x32xf32>
    tpu.vector_store %arg6[%c0_38, %c0_39], %86 {strides = array<i32>} : memref<8x128xf32, #tpu.memory_space<vmem>>, vector<8x32xf32>,
    %c8_40 = arith.constant 8 : index
    %c0_41 = arith.constant 0 : index
    %88 = vector.load %arg5[%c8_40, %c0_41] : memref<32x32xf32, #tpu.memory_space<vmem>>, vector<8x32xf32>
    %c0_42 = arith.constant 0 : index
    %c32_43 = arith.constant 32 : index
    %89 = vector.load %arg6[%c0_42, %c32_43] : memref<8x128xf32, #tpu.memory_space<vmem>>, vector<8x32xf32>
    tpu.vector_store %arg6[%c0_42, %c32_43], %88 {strides = array<i32>} : memref<8x128xf32, #tpu.memory_space<vmem>>, vector<8x32xf32>,
    %c16_44 = arith.constant 16 : index
    %c0_45 = arith.constant 0 : index
    %90 = vector.load %arg5[%c16_44, %c0_45] : memref<32x32xf32, #tpu.memory_space<vmem>>, vector<8x32xf32>
    %c0_46 = arith.constant 0 : index
    %c64_47 = arith.constant 64 : index
    %91 = vector.load %arg6[%c0_46, %c64_47] : memref<8x128xf32, #tpu.memory_space<vmem>>, vector<8x32xf32>
    tpu.vector_store %arg6[%c0_46, %c64_47], %90 {strides = array<i32>} : memref<8x128xf32, #tpu.memory_space<vmem>>, vector<8x32xf32>,
    %c24_48 = arith.constant 24 : index
    %c0_49 = arith.constant 0 : index
    %92 = vector.load %arg5[%c24_48, %c0_49] : memref<32x32xf32, #tpu.memory_space<vmem>>, vector<8x32xf32>
    %c0_50 = arith.constant 0 : index
    %c96 = arith.constant 96 : index
    %93 = vector.load %arg6[%c0_50, %c96] : memref<8x128xf32, #tpu.memory_space<vmem>>, vector<8x32xf32>
    tpu.vector_store %arg6[%c0_50, %c96], %92 {strides = array<i32>} : memref<8x128xf32, #tpu.memory_space<vmem>>, vector<8x32xf32>,
    %c0_51 = arith.constant 0 : index
    %c0_52 = arith.constant 0 : index
    %94 = vector.load %arg6[%c0_51, %c0_52] : memref<8x128xf32, #tpu.memory_space<vmem>>, vector<8x128xf32>
    %cst_53 = arith.constant dense<0.000000e+00> : vector<128xf32>
    %95 = vector.multi_reduction <add>, %94, %cst_53 [0] : vector<8x128xf32> to vector<128xf32>
    %96 = vector.shape_cast %95 : vector<128xf32> to vector<1x128xf32>
    %cst_54 = arith.constant 8.000000e+00 : f32
    %97 = vector.broadcast %cst_54 : f32 to vector<1x128xf32>
    %98 = arith.divf %96, %97 : vector<1x128xf32>
    %99 = vector.broadcast %98 : vector<1x128xf32> to vector<8x128xf32>
    %100 = arith.subf %94, %99 : vector<8x128xf32>
    %101 = arith.mulf %100, %100 : vector<8x128xf32>
    %cst_55 = arith.constant dense<0.000000e+00> : vector<128xf32>
    %102 = vector.multi_reduction <add>, %101, %cst_55 [0] : vector<8x128xf32> to vector<128xf32>
    %103 = vector.shape_cast %102 : vector<128xf32> to vector<1x128xf32>
    %cst_56 = arith.constant 8.000000e+00 : f32
    %104 = vector.broadcast %cst_56 : f32 to vector<1x128xf32>
    %105 = arith.divf %103, %104 : vector<1x128xf32>
    %106 = vector.broadcast %98 : vector<1x128xf32> to vector<8x128xf32>
    %107 = arith.subf %94, %106 : vector<8x128xf32>
    %cst_57 = arith.constant 9.99999974E-6 : f32
    %108 = vector.broadcast %cst_57 : f32 to vector<1x128xf32>
    %109 = arith.addf %105, %108 : vector<1x128xf32>
    %110 = math.rsqrt %109 : vector<1x128xf32>
    %111 = vector.broadcast %110 : vector<1x128xf32> to vector<8x128xf32>
    %112 = arith.mulf %107, %111 : vector<8x128xf32>
    %113 = vector.broadcast %10 : vector<8x1xf32> to vector<8x128xf32>
    %114 = arith.mulf %112, %113 : vector<8x128xf32>
    %115 = vector.broadcast %11 : vector<8x1xf32> to vector<8x128xf32>
    %116 = arith.addf %114, %115 : vector<8x128xf32>
    %117 = arith.truncf %8 : vector<8x8xf32> to vector<8x8xbf16>
    %118 = arith.truncf %116 : vector<8x128xf32> to vector<8x128xbf16>
    %cst_58 = arith.constant dense<0.000000e+00> : vector<8x128xf32>
    %119 = tpu.matmul %117, %118, %cst_58 {dimension_numbers = #tpu.dot_dimension_numbers<[1], [0], [0], [1], [0, 0, 1, 1], [], []>} : vector<8x8xbf16>, vector<8x128xbf16>, vector<8x128xf32> -> vector<8x128xf32>
    %120 = vector.broadcast %12 : vector<8x1xf32> to vector<8x128xf32>
    %121 = arith.addf %119, %120 : vector<8x128xf32>
    %cst_59 = arith.constant 5.000000e-01 : f32
    %122 = vector.broadcast %cst_59 : f32 to vector<8x128xf32>
    %123 = arith.mulf %122, %121 : vector<8x128xf32>
    %cst_60 = arith.constant 4.471500e-02 : f32
    %124 = vector.broadcast %cst_60 : f32 to vector<8x128xf32>
    %125 = arith.mulf %124, %121 : vector<8x128xf32>
    %126 = arith.mulf %125, %121 : vector<8x128xf32>
    %127 = arith.mulf %126, %121 : vector<8x128xf32>
    %128 = arith.addf %121, %127 : vector<8x128xf32>
    %cst_61 = arith.constant 0.797884583 : f32
    %129 = vector.broadcast %cst_61 : f32 to vector<8x128xf32>
    %130 = arith.mulf %129, %128 : vector<8x128xf32>
    %131 = math.tanh %130 : vector<8x128xf32>
    %cst_62 = arith.constant 1.000000e+00 : f32
    %132 = vector.broadcast %cst_62 : f32 to vector<8x128xf32>
    %133 = arith.addf %132, %131 : vector<8x128xf32>
    %134 = arith.mulf %123, %133 : vector<8x128xf32>
    %135 = arith.truncf %9 : vector<8x8xf32> to vector<8x8xbf16>
    %136 = arith.truncf %134 : vector<8x128xf32> to vector<8x128xbf16>
    %cst_63 = arith.constant dense<0.000000e+00> : vector<8x128xf32>
    %137 = tpu.matmul %135, %136, %cst_63 {dimension_numbers = #tpu.dot_dimension_numbers<[1], [0], [0], [1], [0, 0, 1, 1], [], []>} : vector<8x8xbf16>, vector<8x128xbf16>, vector<8x128xf32> -> vector<8x128xf32>
    %138 = vector.broadcast %13 : vector<8x1xf32> to vector<8x128xf32>
    %139 = arith.addf %137, %138 : vector<8x128xf32>
    %140 = arith.addf %94, %139 : vector<8x128xf32>
    %141 = vector.extract_strided_slice %140 {offsets = [0, 0], sizes = [8, 32], strides = [1, 1]} : vector<8x128xf32> to vector<8x32xf32>
    %c0_64 = arith.constant 0 : index
    %c0_65 = arith.constant 0 : index
    %142 = vector.load %arg7[%c0_64, %c0_65] : memref<32x32xf32, #tpu.memory_space<vmem>>, vector<8x32xf32>
    tpu.vector_store %arg7[%c0_64, %c0_65], %141 {strides = array<i32>} : memref<32x32xf32, #tpu.memory_space<vmem>>, vector<8x32xf32>,
    %143 = vector.extract_strided_slice %140 {offsets = [0, 32], sizes = [8, 32], strides = [1, 1]} : vector<8x128xf32> to vector<8x32xf32>
    %c8_66 = arith.constant 8 : index
    %c0_67 = arith.constant 0 : index
    %144 = vector.load %arg7[%c8_66, %c0_67] : memref<32x32xf32, #tpu.memory_space<vmem>>, vector<8x32xf32>
    tpu.vector_store %arg7[%c8_66, %c0_67], %143 {strides = array<i32>} : memref<32x32xf32, #tpu.memory_space<vmem>>, vector<8x32xf32>,
    %145 = vector.extract_strided_slice %140 {offsets = [0, 64], sizes = [8, 32], strides = [1, 1]} : vector<8x128xf32> to vector<8x32xf32>
    %c16_68 = arith.constant 16 : index
    %c0_69 = arith.constant 0 : index
    %146 = vector.load %arg7[%c16_68, %c0_69] : memref<32x32xf32, #tpu.memory_space<vmem>>, vector<8x32xf32>
    tpu.vector_store %arg7[%c16_68, %c0_69], %145 {strides = array<i32>} : memref<32x32xf32, #tpu.memory_space<vmem>>, vector<8x32xf32>,
    %147 = vector.extract_strided_slice %140 {offsets = [0, 96], sizes = [8, 32], strides = [1, 1]} : vector<8x128xf32> to vector<8x32xf32>
    %c24_70 = arith.constant 24 : index
    %c0_71 = arith.constant 0 : index
    %148 = vector.load %arg7[%c24_70, %c0_71] : memref<32x32xf32, #tpu.memory_space<vmem>>, vector<8x32xf32>
    tpu.vector_store %arg7[%c24_70, %c0_71], %147 {strides = array<i32>} : memref<32x32xf32, #tpu.memory_space<vmem>>, vector<8x32xf32>,
    %c0_72 = arith.constant 0 : index
    %c0_73 = arith.constant 0 : index
    %149 = tpu.strided_load %arg7[%c0_72, %c0_73] {strides = array<i32: 8, 1>} : memref<32x32xf32, #tpu.memory_space<vmem>>, vector<4x32xf32>
    %c0_74 = arith.constant 0 : index
    %c0_75 = arith.constant 0 : index
    %150 = vector.load %arg8[%c0_74, %c0_75] : memref<4x256xf32, #tpu.memory_space<vmem>>, vector<4x32xf32>
    tpu.vector_store %arg8[%c0_74, %c0_75], %149 {strides = array<i32>} : memref<4x256xf32, #tpu.memory_space<vmem>>, vector<4x32xf32>,
    %c1 = arith.constant 1 : index
    %c0_76 = arith.constant 0 : index
    %151 = tpu.strided_load %arg7[%c1, %c0_76] {strides = array<i32: 8, 1>} : memref<32x32xf32, #tpu.memory_space<vmem>>, vector<4x32xf32>
    %c0_77 = arith.constant 0 : index
    %c32_78 = arith.constant 32 : index
    %152 = vector.load %arg8[%c0_77, %c32_78] : memref<4x256xf32, #tpu.memory_space<vmem>>, vector<4x32xf32>
    tpu.vector_store %arg8[%c0_77, %c32_78], %151 {strides = array<i32>} : memref<4x256xf32, #tpu.memory_space<vmem>>, vector<4x32xf32>,
    %c2 = arith.constant 2 : index
    %c0_79 = arith.constant 0 : index
    %153 = tpu.strided_load %arg7[%c2, %c0_79] {strides = array<i32: 8, 1>} : memref<32x32xf32, #tpu.memory_space<vmem>>, vector<4x32xf32>
    %c0_80 = arith.constant 0 : index
    %c64_81 = arith.constant 64 : index
    %154 = vector.load %arg8[%c0_80, %c64_81] : memref<4x256xf32, #tpu.memory_space<vmem>>, vector<4x32xf32>
    tpu.vector_store %arg8[%c0_80, %c64_81], %153 {strides = array<i32>} : memref<4x256xf32, #tpu.memory_space<vmem>>, vector<4x32xf32>,
    %c3 = arith.constant 3 : index
    %c0_82 = arith.constant 0 : index
    %155 = tpu.strided_load %arg7[%c3, %c0_82] {strides = array<i32: 8, 1>} : memref<32x32xf32, #tpu.memory_space<vmem>>, vector<4x32xf32>
    %c0_83 = arith.constant 0 : index
    %c96_84 = arith.constant 96 : index
    %156 = vector.load %arg8[%c0_83, %c96_84] : memref<4x256xf32, #tpu.memory_space<vmem>>, vector<4x32xf32>
    tpu.vector_store %arg8[%c0_83, %c96_84], %155 {strides = array<i32>} : memref<4x256xf32, #tpu.memory_space<vmem>>, vector<4x32xf32>,
    %c4 = arith.constant 4 : index
    %c0_85 = arith.constant 0 : index
    %157 = tpu.strided_load %arg7[%c4, %c0_85] {strides = array<i32: 8, 1>} : memref<32x32xf32, #tpu.memory_space<vmem>>, vector<4x32xf32>
    %c0_86 = arith.constant 0 : index
    %c128 = arith.constant 128 : index
    %158 = vector.load %arg8[%c0_86, %c128] : memref<4x256xf32, #tpu.memory_space<vmem>>, vector<4x32xf32>
    tpu.vector_store %arg8[%c0_86, %c128], %157 {strides = array<i32>} : memref<4x256xf32, #tpu.memory_space<vmem>>, vector<4x32xf32>,
    %c5 = arith.constant 5 : index
    %c0_87 = arith.constant 0 : index
    %159 = tpu.strided_load %arg7[%c5, %c0_87] {strides = array<i32: 8, 1>} : memref<32x32xf32, #tpu.memory_space<vmem>>, vector<4x32xf32>
    %c0_88 = arith.constant 0 : index
    %c160 = arith.constant 160 : index
    %160 = vector.load %arg8[%c0_88, %c160] : memref<4x256xf32, #tpu.memory_space<vmem>>, vector<4x32xf32>
    tpu.vector_store %arg8[%c0_88, %c160], %159 {strides = array<i32>} : memref<4x256xf32, #tpu.memory_space<vmem>>, vector<4x32xf32>,
    %c6 = arith.constant 6 : index
    %c0_89 = arith.constant 0 : index
    %161 = tpu.strided_load %arg7[%c6, %c0_89] {strides = array<i32: 8, 1>} : memref<32x32xf32, #tpu.memory_space<vmem>>, vector<4x32xf32>
    %c0_90 = arith.constant 0 : index
    %c192 = arith.constant 192 : index
    %162 = vector.load %arg8[%c0_90, %c192] : memref<4x256xf32, #tpu.memory_space<vmem>>, vector<4x32xf32>
    tpu.vector_store %arg8[%c0_90, %c192], %161 {strides = array<i32>} : memref<4x256xf32, #tpu.memory_space<vmem>>, vector<4x32xf32>,
    %c7 = arith.constant 7 : index
    %c0_91 = arith.constant 0 : index
    %163 = tpu.strided_load %arg7[%c7, %c0_91] {strides = array<i32: 8, 1>} : memref<32x32xf32, #tpu.memory_space<vmem>>, vector<4x32xf32>
    %c0_92 = arith.constant 0 : index
    %c224 = arith.constant 224 : index
    %164 = vector.load %arg8[%c0_92, %c224] : memref<4x256xf32, #tpu.memory_space<vmem>>, vector<4x32xf32>
    tpu.vector_store %arg8[%c0_92, %c224], %163 {strides = array<i32>} : memref<4x256xf32, #tpu.memory_space<vmem>>, vector<4x32xf32>,
    %c0_93 = arith.constant 0 : index
    %c0_94 = arith.constant 0 : index
    %165 = vector.load %arg8[%c0_93, %c0_94] : memref<4x256xf32, #tpu.memory_space<vmem>>, vector<4x256xf32>
    %cst_95 = arith.constant dense<0.000000e+00> : vector<256xf32>
    %166 = vector.multi_reduction <add>, %165, %cst_95 [0] : vector<4x256xf32> to vector<256xf32>
    %167 = vector.shape_cast %166 : vector<256xf32> to vector<1x256xf32>
    %cst_96 = arith.constant 4.000000e+00 : f32
    %168 = vector.broadcast %cst_96 : f32 to vector<1x256xf32>
    %169 = arith.divf %167, %168 : vector<1x256xf32>
    %170 = vector.broadcast %169 : vector<1x256xf32> to vector<4x256xf32>
    %171 = arith.subf %165, %170 : vector<4x256xf32>
    %172 = arith.mulf %171, %171 : vector<4x256xf32>
    %cst_97 = arith.constant dense<0.000000e+00> : vector<256xf32>
    %173 = vector.multi_reduction <add>, %172, %cst_97 [0] : vector<4x256xf32> to vector<256xf32>
    %174 = vector.shape_cast %173 : vector<256xf32> to vector<1x256xf32>
    %cst_98 = arith.constant 4.000000e+00 : f32
    %175 = vector.broadcast %cst_98 : f32 to vector<1x256xf32>
    %176 = arith.divf %174, %175 : vector<1x256xf32>
    %177 = vector.broadcast %169 : vector<1x256xf32> to vector<4x256xf32>
    %178 = arith.subf %165, %177 : vector<4x256xf32>
    %cst_99 = arith.constant 9.99999974E-6 : f32
    %179 = vector.broadcast %cst_99 : f32 to vector<1x256xf32>
    %180 = arith.addf %176, %179 : vector<1x256xf32>
    %181 = math.rsqrt %180 : vector<1x256xf32>
    %182 = vector.broadcast %181 : vector<1x256xf32> to vector<4x256xf32>
    %183 = arith.mulf %178, %182 : vector<4x256xf32>
    %184 = vector.broadcast %16 : vector<4x1xf32> to vector<4x256xf32>
    %185 = arith.mulf %183, %184 : vector<4x256xf32>
    %186 = vector.broadcast %17 : vector<4x1xf32> to vector<4x256xf32>
    %187 = arith.addf %185, %186 : vector<4x256xf32>
    %188 = arith.truncf %14 : vector<4x4xf32> to vector<4x4xbf16>
    %189 = arith.truncf %187 : vector<4x256xf32> to vector<4x256xbf16>
    %cst_100 = arith.constant dense<0.000000e+00> : vector<4x256xf32>
    %190 = tpu.matmul %188, %189, %cst_100 {dimension_numbers = #tpu.dot_dimension_numbers<[1], [0], [0], [1], [0, 0, 1, 1], [], []>} : vector<4x4xbf16>, vector<4x256xbf16>, vector<4x256xf32> -> vector<4x256xf32>
    %191 = vector.broadcast %18 : vector<4x1xf32> to vector<4x256xf32>
    %192 = arith.addf %190, %191 : vector<4x256xf32>
    %cst_101 = arith.constant 5.000000e-01 : f32
    %193 = vector.broadcast %cst_101 : f32 to vector<4x256xf32>
    %194 = arith.mulf %193, %192 : vector<4x256xf32>
    %cst_102 = arith.constant 4.471500e-02 : f32
    %195 = vector.broadcast %cst_102 : f32 to vector<4x256xf32>
    %196 = arith.mulf %195, %192 : vector<4x256xf32>
    %197 = arith.mulf %196, %192 : vector<4x256xf32>
    %198 = arith.mulf %197, %192 : vector<4x256xf32>
    %199 = arith.addf %192, %198 : vector<4x256xf32>
    %cst_103 = arith.constant 0.797884583 : f32
    %200 = vector.broadcast %cst_103 : f32 to vector<4x256xf32>
    %201 = arith.mulf %200, %199 : vector<4x256xf32>
    %202 = math.tanh %201 : vector<4x256xf32>
    %cst_104 = arith.constant 1.000000e+00 : f32
    %203 = vector.broadcast %cst_104 : f32 to vector<4x256xf32>
    %204 = arith.addf %203, %202 : vector<4x256xf32>
    %205 = arith.mulf %194, %204 : vector<4x256xf32>
    %206 = arith.truncf %15 : vector<4x4xf32> to vector<4x4xbf16>
    %207 = arith.truncf %205 : vector<4x256xf32> to vector<4x256xbf16>
    %cst_105 = arith.constant dense<0.000000e+00> : vector<4x256xf32>
    %208 = tpu.matmul %206, %207, %cst_105 {dimension_numbers = #tpu.dot_dimension_numbers<[1], [0], [0], [1], [0, 0, 1, 1], [], []>} : vector<4x4xbf16>, vector<4x256xbf16>, vector<4x256xf32> -> vector<4x256xf32>
    %209 = vector.broadcast %19 : vector<4x1xf32> to vector<4x256xf32>
    %210 = arith.addf %208, %209 : vector<4x256xf32>
    %211 = arith.addf %165, %210 : vector<4x256xf32>
    %212 = vector.extract_strided_slice %211 {offsets = [0, 0], sizes = [4, 32], strides = [1, 1]} : vector<4x256xf32> to vector<4x32xf32>
    %c0_106 = arith.constant 0 : index
    %c0_107 = arith.constant 0 : index
    %213 = vector.load %arg9[%c0_106, %c0_107] : memref<32x32xf32, #tpu.memory_space<vmem>>, vector<4x32xf32>
    tpu.vector_store %arg9[%c0_106, %c0_107], %212 {strides = array<i32>} : memref<32x32xf32, #tpu.memory_space<vmem>>, vector<4x32xf32>,
    %214 = vector.extract_strided_slice %211 {offsets = [0, 32], sizes = [4, 32], strides = [1, 1]} : vector<4x256xf32> to vector<4x32xf32>
    %c4_108 = arith.constant 4 : index
    %c0_109 = arith.constant 0 : index
    %215 = vector.load %arg9[%c4_108, %c0_109] : memref<32x32xf32, #tpu.memory_space<vmem>>, vector<4x32xf32>
    tpu.vector_store %arg9[%c4_108, %c0_109], %214 {strides = array<i32>} : memref<32x32xf32, #tpu.memory_space<vmem>>, vector<4x32xf32>,
    %216 = vector.extract_strided_slice %211 {offsets = [0, 64], sizes = [4, 32], strides = [1, 1]} : vector<4x256xf32> to vector<4x32xf32>
    %c8_110 = arith.constant 8 : index
    %c0_111 = arith.constant 0 : index
    %217 = vector.load %arg9[%c8_110, %c0_111] : memref<32x32xf32, #tpu.memory_space<vmem>>, vector<4x32xf32>
    tpu.vector_store %arg9[%c8_110, %c0_111], %216 {strides = array<i32>} : memref<32x32xf32, #tpu.memory_space<vmem>>, vector<4x32xf32>,
    %218 = vector.extract_strided_slice %211 {offsets = [0, 96], sizes = [4, 32], strides = [1, 1]} : vector<4x256xf32> to vector<4x32xf32>
    %c12 = arith.constant 12 : index
    %c0_112 = arith.constant 0 : index
    %219 = vector.load %arg9[%c12, %c0_112] : memref<32x32xf32, #tpu.memory_space<vmem>>, vector<4x32xf32>
    tpu.vector_store %arg9[%c12, %c0_112], %218 {strides = array<i32>} : memref<32x32xf32, #tpu.memory_space<vmem>>, vector<4x32xf32>,
    %220 = vector.extract_strided_slice %211 {offsets = [0, 128], sizes = [4, 32], strides = [1, 1]} : vector<4x256xf32> to vector<4x32xf32>
    %c16_113 = arith.constant 16 : index
    %c0_114 = arith.constant 0 : index
    %221 = vector.load %arg9[%c16_113, %c0_114] : memref<32x32xf32, #tpu.memory_space<vmem>>, vector<4x32xf32>
    tpu.vector_store %arg9[%c16_113, %c0_114], %220 {strides = array<i32>} : memref<32x32xf32, #tpu.memory_space<vmem>>, vector<4x32xf32>,
    %222 = vector.extract_strided_slice %211 {offsets = [0, 160], sizes = [4, 32], strides = [1, 1]} : vector<4x256xf32> to vector<4x32xf32>
    %c20_115 = arith.constant 20 : index
    %c0_116 = arith.constant 0 : index
    %223 = vector.load %arg9[%c20_115, %c0_116] : memref<32x32xf32, #tpu.memory_space<vmem>>, vector<4x32xf32>
    tpu.vector_store %arg9[%c20_115, %c0_116], %222 {strides = array<i32>} : memref<32x32xf32, #tpu.memory_space<vmem>>, vector<4x32xf32>,
    %224 = vector.extract_strided_slice %211 {offsets = [0, 192], sizes = [4, 32], strides = [1, 1]} : vector<4x256xf32> to vector<4x32xf32>
    %c24_117 = arith.constant 24 : index
    %c0_118 = arith.constant 0 : index
    %225 = vector.load %arg9[%c24_117, %c0_118] : memref<32x32xf32, #tpu.memory_space<vmem>>, vector<4x32xf32>
    tpu.vector_store %arg9[%c24_117, %c0_118], %224 {strides = array<i32>} : memref<32x32xf32, #tpu.memory_space<vmem>>, vector<4x32xf32>,
    %226 = vector.extract_strided_slice %211 {offsets = [0, 224], sizes = [4, 32], strides = [1, 1]} : vector<4x256xf32> to vector<4x32xf32>
    %c28_119 = arith.constant 28 : index
    %c0_120 = arith.constant 0 : index
    %227 = vector.load %arg9[%c28_119, %c0_120] : memref<32x32xf32, #tpu.memory_space<vmem>>, vector<4x32xf32>
    tpu.vector_store %arg9[%c28_119, %c0_120], %226 {strides = array<i32>} : memref<32x32xf32, #tpu.memory_space<vmem>>, vector<4x32xf32>,
    %228 = arith.truncf %3 : vector<2x32xf32> to vector<2x32xbf16>
    %c0_121 = arith.constant 0 : index
    %c0_122 = arith.constant 0 : index
    %229 = vector.load %arg9[%c0_121, %c0_122] : memref<32x32xf32, #tpu.memory_space<vmem>>, vector<32x32xf32>
    %230 = arith.truncf %229 : vector<32x32xf32> to vector<32x32xbf16>
    "tpu.trace_start"() <{level = 10 : i32, message = "dh,rh->dr"}> : () -> ()
    %cst_123 = arith.constant dense<0.000000e+00> : vector<2x32xf32>
    %231 = tpu.matmul %228, %230, %cst_123 {dimension_numbers = #tpu.dot_dimension_numbers<[1], [1], [0], [0], [0, 0, 1, 0], [], []>} : vector<2x32xbf16>, vector<32x32xbf16>, vector<2x32xf32> -> vector<2x32xf32>
    "tpu.trace_stop"() : () -> ()
    %c0_124 = arith.constant 0 : index
    %c0_125 = arith.constant 0 : index
    %c0_126 = arith.constant 0 : index
    %232 = vector.load %arg4[%c0_124, %c0_125, %c0_126] : memref<1x2x32xf32, #tpu.memory_space<vmem>>, vector<1x2x32xf32>
    %233 = vector.shape_cast %232 : vector<1x2x32xf32> to vector<2x32xf32>
    %234 = vector.shape_cast %231 : vector<2x32xf32> to vector<1x2x32xf32>
    tpu.vector_store %arg4[%c0_124, %c0_125, %c0_126], %234 {strides = array<i32>} : memref<1x2x32xf32, #tpu.memory_space<vmem>>, vector<1x2x32xf32>,
    return
  }
  func.func @transform_0(%arg0: i32) -> (i32, i32, i32) {
    %c0_i32 = arith.constant 0 : i32
    %c0_i32_0 = arith.constant 0 : i32
    %c0_i32_1 = arith.constant 0 : i32
    return %arg0, %c0_i32, %c0_i32_0 : i32, i32, i32
  }
  func.func @transform_1(%arg0: i32) -> (i32, i32) {
    %c0_i32 = arith.constant 0 : i32
    %c0_i32_0 = arith.constant 0 : i32
    %c0_i32_1 = arith.constant 0 : i32
    return %c0_i32, %c0_i32_0 : i32, i32
  }
  func.func @transform_2(%arg0: i32) -> (i32, i32) {
    %c0_i32 = arith.constant 0 : i32
    %c0_i32_0 = arith.constant 0 : i32
    %c0_i32_1 = arith.constant 0 : i32
    return %c0_i32, %c0_i32_0 : i32, i32
  }
  func.func @transform_3(%arg0: i32) -> (i32, i32, i32) {
    %c0_i32 = arith.constant 0 : i32
    %c0_i32_0 = arith.constant 0 : i32
    %c0_i32_1 = arith.constant 0 : i32
    return %arg0, %c0_i32, %c0_i32_0 : i32, i32, i32
  }
}

</mosaic_0001>

<llo_original>
// kernel: tpu_custom_call.1
$region0: #{tpu_custom_call.1}
  #allocation0 [shape = 'u32[]', space=smem, size = 0x4, offset = 0x4, fixed_abs, tag = 'smem constant byte address 0x4 - core index']
  #allocation1 [shape = 'u32[72,128]{1,0:T(1,128)}', space=vmem, size = 0x9000, scoped, tag = 'internal scratch']
  #allocation2 [shape = 'f32[32,32]{1,0:T(8,128)}', space=vmem, size = 0x4000, scoped, tag = 'scratch operand']
  #allocation3 [shape = 'f32[8,128]{1,0:T(8,128)}', space=vmem, size = 0x1000, scoped, tag = 'scratch operand']
  #allocation4 [shape = 'f32[32,32]{1,0:T(8,128)}', space=vmem, size = 0x4000, scoped, tag = 'scratch operand']
  #allocation5 [shape = 'f32[4,256]{1,0:T(4,128)}', space=vmem, size = 0x1000, scoped, tag = 'scratch operand']
  #allocation6 [shape = 'f32[32,32]{1,0:T(8,128)}', space=vmem, size = 0x4000, scoped, tag = 'scratch operand']
  %s0 = inlined_call_operand.vmem [shape: f32[2,32,3], index: 0, kind: input, shape index: {}]
  %s1 = inlined_call_operand.vmem [shape: f32[73,32], index: 1, kind: input, shape index: {}]
  %s2 = inlined_call_operand.vmem [shape: f32[8,32], index: 2, kind: input, shape index: {}]
  %s3 = inlined_call_operand.hbm [shape: f32[2,2,32], index: 3, kind: output, shape index: {}]
  %s4 = sld [smem:[#allocation0]]
  $region45: #{tpu_custom_call.1} parent=0
    _
  %s6 = ssub.s32 1, %s4
  %s7 = scalar_select 0, %s6, %s4
  $region1: #{tpu_custom_call.1} parent=0
    #allocation7 [shape = 'u8[2048]{0}', space=vmem, size = 0x800, scoped, tag = 'output window, operand 0']
    #allocation8 [shape = 's32[2]{0}', space=sflag, size = 0x8, scoped, tag = 'scoped memory for tpu_custom_call.1']
    %8 = vsyncpa [#allocation8], 0
    %s9 = scalar_lea.sflag [#allocation8], 1
    %10 = vsyncpa %s9, 0
    loop: start=0, step=1, limit=4
    $region2: #{tpu_custom_call.1} parent=1 // loop_pre_header
      _
    $region3: #{tpu_custom_call.1} parent=1 // loop_header
      %s12 = sphi 0, %s16
      %p13 = scmp.ge.s32.totalorder %s12, 4
      %s22 = sphi 0, %s24
      %s25 = sphi 0, %s22
      %s26 = sphi 0, %s25
      %s42 = sphi 0, %s26
      %s46 = sphi 0, %s46
      %s48 = sphi 0, %s46
      %s49 = sphi 0, %s48
      %s63 = sphi 0, %s49
      %s67 = sphi 0, %s67
      %s69 = sphi 0, %s67
      %s70 = sphi 0, %s69
      %s84 = sphi 0, %s70
      %s90 = sphi 0, %s92
      %s93 = sphi 0, %s90
      %s94 = sphi 0, %s93
      %s110 = sphi 0, %s94
    $region4: #{tpu_custom_call.1} parent=1 // loop_header_branch
      %15 = sbr.rel (%p13) target = $region8
    $region5: #{tpu_custom_call.1} parent=1 // loop_body
      %s17 = ssub.s32 %s12, 1
      %s18 = ssub.s32 %s12, 2
      %s19 = sadd.s32 %s12, 1
      %s20 = ssub.s32 %s12, %s19
      %p21 = scmp.eq.s32.totalorder %s20, 0
      %s23 = sadd.s32 %s22, 1
      %s24 = scalar_select %p21, %s22, %s23
      %p27 = pneg %p21
      %p28 = scmp.eq.s32.totalorder %s12, 1
      %p29 = por %p27, %p28
      %p30 = scmp.ne.s32.totalorder %s22, %s25
      %p31 = scmp.eq.s32.totalorder %s12, 0
      %p32 = por %p30, %p31
      %p33 = scmp.ne.s32.totalorder %s22, %s25
      %p34 = scmp.eq.s32.totalorder %s17, 1
      %p35 = por %p33, %p34
      %p36 = scmp.ne.s32.totalorder %s25, %s26
      %p37 = scmp.eq.s32.totalorder %s17, 0
      %p38 = por %p36, %p37
      %p39 = scmp.ne.s32.totalorder %s25, %s26
      %p40 = scmp.eq.s32.totalorder %s18, 1
      %p41 = por %p39, %p40
      %p43 = scmp.ne.s32.totalorder %s26, %s42
      %p44 = scmp.eq.s32.totalorder %s18, 0
      %p45 = por %p43, %p44
      %s47 = sadd.s32 %s46, 1
      %p50 = scmp.eq.s32.totalorder %s12, 1
      %p51 = scmp.ne.s32.totalorder %s46, %s48
      %p52 = scmp.eq.s32.totalorder %s12, 0
      %p53 = por %p51, %p52
      %p54 = scmp.ne.s32.totalorder %s46, %s48
      %p55 = scmp.eq.s32.totalorder %s17, 1
      %p56 = por %p54, %p55
      %p57 = scmp.ne.s32.totalorder %s48, %s49
      %p58 = scmp.eq.s32.totalorder %s17, 0
      %p59 = por %p57, %p58
      %p60 = scmp.ne.s32.totalorder %s48, %s49
      %p61 = scmp.eq.s32.totalorder %s18, 1
      %p62 = por %p60, %p61
      %p64 = scmp.ne.s32.totalorder %s49, %s63
      %p65 = scmp.eq.s32.totalorder %s18, 0
      %p66 = por %p64, %p65
      %s68 = sadd.s32 %s67, 1
      %p71 = scmp.eq.s32.totalorder %s12, 1
      %p72 = scmp.ne.s32.totalorder %s67, %s69
      %p73 = scmp.eq.s32.totalorder %s12, 0
      %p74 = por %p72, %p73
      %p75 = scmp.ne.s32.totalorder %s67, %s69
      %p76 = scmp.eq.s32.totalorder %s17, 1
      %p77 = por %p75, %p76
      %p78 = scmp.ne.s32.totalorder %s69, %s70
      %p79 = scmp.eq.s32.totalorder %s17, 0
      %p80 = por %p78, %p79
      %p81 = scmp.ne.s32.totalorder %s69, %s70
      %p82 = scmp.eq.s32.totalorder %s18, 1
      %p83 = por %p81, %p82
      %p85 = scmp.ne.s32.totalorder %s70, %s84
      %p86 = scmp.eq.s32.totalorder %s18, 0
      %p87 = por %p85, %p86
      %s88 = ssub.s32 %s12, %s19
      %p89 = scmp.eq.s32.totalorder %s88, 0
      %s91 = sadd.s32 %s90, 1
      %s92 = scalar_select %p89, %s90, %s91
      %p95 = pneg %p89
      %p96 = scmp.eq.s32.totalorder %s12, 1
      %p97 = por %p95, %p96
      %p98 = scmp.ne.s32.totalorder %s90, %s93
      %p99 = scmp.eq.s32.totalorder %s12, 0
      %p100 = por %p98, %p99
      %p101 = scmp.ne.s32.totalorder %s90, %s93
      %p102 = scmp.eq.s32.totalorder %s17, 1
      %p103 = por %p101, %p102
      %p104 = scmp.ne.s32.totalorder %s93, %s94
      %p105 = scmp.eq.s32.totalorder %s17, 0
      %p106 = por %p104, %p105
      %p107 = scmp.ne.s32.totalorder %s93, %s94
      %p108 = scmp.eq.s32.totalorder %s18, 1
      %p109 = por %p107, %p108
      %p111 = scmp.ne.s32.totalorder %s94, %s110
      %p112 = scmp.eq.s32.totalorder %s18, 0
      %p113 = por %p111, %p112
      %p114 = scmp.le.s32.totalorder 1, %s12
      %p115 = scmp.lt.s32.totalorder %s12, 3
      %p116 = pnand %p114, %p115
      %p117 = pneg %p116
      // Predicated region
      $region9: #{tpu_custom_call.1} parent=5 // pred_check
        _
      $region10: #{tpu_custom_call.1} parent=5 // pred_check_branch
        %119 = sbr.rel (%p116) target = $region12
      $region11: #{tpu_custom_call.1} parent=5 // pred_region
        %s120 = ssub.s32 %s12, 1
        // Predicated region
        $region13: #{tpu_custom_call.1} parent=11 // pred_check
          %p121 = pneg %p59
        $region14: #{tpu_custom_call.1} parent=11 // pred_check_branch
          %123 = sbr.rel (%p121) target = $region16
        $region15: #{tpu_custom_call.1} parent=11 // pred_region
          _
        $region16: #{tpu_custom_call.1} parent=11 // pred_fallthru
          _
        // Predicated region
        $region17: #{tpu_custom_call.1} parent=11 // pred_check
          %p124 = pneg %p80
        $region18: #{tpu_custom_call.1} parent=11 // pred_check_branch
          %126 = sbr.rel (%p124) target = $region20
        $region19: #{tpu_custom_call.1} parent=11 // pred_region
          _
        $region20: #{tpu_custom_call.1} parent=11 // pred_fallthru
          _
      $region12: #{tpu_custom_call.1} parent=5 // pred_fallthru
        _
      %p127 = scmp.lt.s32.totalorder %s12, 2
      // Predicated region
      $region21: #{tpu_custom_call.1} parent=5 // pred_check
        %p128 = pneg %p127
      $region22: #{tpu_custom_call.1} parent=5 // pred_check_branch
        %130 = sbr.rel (%p128) target = $region24
      $region23: #{tpu_custom_call.1} parent=5 // pred_region
        // Predicated region
        $region25: #{tpu_custom_call.1} parent=23 // pred_check
          %p131 = pneg %p32
        $region26: #{tpu_custom_call.1} parent=23 // pred_check_branch
          %133 = sbr.rel (%p131) target = $region28
        $region27: #{tpu_custom_call.1} parent=23 // pred_region
          %p134 = scmp.lt.s32.totalorder %s12, 1
          %s135 = scalar_select %p134, %s12, 1
          %s136 = smul.addr %s135, 4
          %s137 = smul.addr %s136, 8
          %s138 = scalar_lea.vmem %s0, %s137
        $region28: #{tpu_custom_call.1} parent=23 // pred_fallthru
          _
      $region24: #{tpu_custom_call.1} parent=5 // pred_fallthru
        _
      %p139 = scmp.le.s32.totalorder 1, %s12
      %p140 = scmp.lt.s32.totalorder %s12, 3
      %p141 = pnand %p139, %p140
      %p142 = pneg %p141
      // Predicated region
      $region29: #{tpu_custom_call.1} parent=5 // pred_check
        _
      $region30: #{tpu_custom_call.1} parent=5 // pred_check_branch
        %144 = sbr.rel (%p141) target = $region32
      $region31: #{tpu_custom_call.1} parent=5 // pred_region
        %s145 = ssub.s32 %s12, 1
        %p146 = scmp.lt.s32.totalorder %s17, 1
        %s147 = scalar_select %p146, %s17, 1
        %s148 = smul.addr %s147, 4
        %s149 = smul.addr %s148, 8
        %s150 = scalar_lea.vmem %s0, %s149
        %p151 = pneg %p38
        %p152 = pneg %p35
        %p153 = pneg %p59
        %p154 = pneg %p56
        %p155 = pneg %p80
        %p156 = pneg %p77
        %p157 = pneg %p106
        %p158 = pneg %p103
        %s159 = sand.u32 %s93, 1
        %s160 = scalar_lea.sflag [#allocation8], %s159
        %s161 = sand.u32 %s93, 1
        %s162 = smul.addr %s161, 2
        %s163 = scalar_lea.vmem [#allocation7], %s162
        %p164 = scmp.lt.s32.totalorder %s17, 1
        %s165 = scalar_select %p164, %s17, 1
        %s166 = smul.addr %s165, 4
        %s167 = smul.addr %s166, 8
        %s168 = scalar_lea.vmem %s0, %s167
        %v170 = vld [vmem:[%s1] sm:$0xff]
        %v171 = vld [vmem:[%s1 + $0x8] sm:$0xff]
        %v172 = vld [vmem:[%s1 + $0x10] sm:$0xff]
        %v173 = vld [vmem:[%s1 + $0x18] sm:$0xff]
        %v174 = vld [vmem:[%s1 + $0x20] sm:$0xff]
        %v175 = vld [vmem:[%s1 + $0x28] sm:$0xff]
        %v176 = vld [vmem:[%s1 + $0x30] sm:$0xff]
        %v177 = vld [vmem:[%s1 + $0x38] sm:$0xff]
        %v178 = vld [vmem:[%s1 + $0x40] sm:$0x7]
        %v179 = vld [vmem:[%s1 + $0x43] sm:$0x3]
        %v180 = vld [vmem:[%s1 + $0x45] sm:$0x1]
        %v181 = vld [vmem:[%s1 + $0x46] sm:$0x1]
        %v182 = vld [vmem:[%s1 + $0x47] sm:$0x1]
        %v183 = vld [vmem:[%s1 + $0x48] sm:$0x1]
        %v184 = vld [vmem:[%s2] sm:$0xff]
        %v185 = vld [vmem:[%s2] sm:$0xf]
        %v186 = vld [vmem:[%s168] sm:$0xff]
        %v187 = vld [vmem:[%s168 + $0x8] sm:$0xff]
        %v188 = vld [vmem:[%s168 + $0x10] sm:$0xff]
        %v189 = vld [vmem:[%s168 + $0x18] sm:$0xff]
        %191 = vset.pattern.permute.xlu0 0
        %192 = vperm.xlu0 %191, %v186
        %v193 = vpop.permute.xlu0 %192
        %196 = vset.pattern.permute.xlu0 0
        %197 = vperm.xlu0 %196, %v187
        %v198 = vpop.permute.xlu0 %197
        %201 = vset.pattern.permute.xlu0 0
        %202 = vperm.xlu0 %201, %v188
        %v203 = vpop.permute.xlu0 %202
        %206 = vset.pattern.permute.xlu0 0
        %207 = vperm.xlu0 %206, %v189
        %v208 = vpop.permute.xlu0 %207
        %v210 = vperm.slane %v178, 0
        %v211 = vmul.f32 %v193, %v210
        %v212 = vmul.f32 %v198, %v210
        %v213 = vmul.f32 %v203, %v210
        %v214 = vmul.f32 %v208, %v210
        %215 = vset.pattern.permute.xlu0 1
        %216 = vperm.xlu0 %215, %v186
        %v217 = vpop.permute.xlu0 %216
        %219 = vset.pattern.permute.xlu0 1
        %220 = vperm.xlu0 %219, %v187
        %v221 = vpop.permute.xlu0 %220
        %223 = vset.pattern.permute.xlu0 1
        %224 = vperm.xlu0 %223, %v188
        %v225 = vpop.permute.xlu0 %224
        %227 = vset.pattern.permute.xlu0 1
        %228 = vperm.xlu0 %227, %v189
        %v229 = vpop.permute.xlu0 %228
        %v231 = vperm.slane %v178, 1
        %v232 = vmul.f32 %v217, %v231
        %v233 = vmul.f32 %v221, %v231
        %v234 = vmul.f32 %v225, %v231
        %v235 = vmul.f32 %v229, %v231
        %v236 = vadd.f32 %v211, %v232
        %v237 = vadd.f32 %v212, %v233
        %v238 = vadd.f32 %v213, %v234
        %v239 = vadd.f32 %v214, %v235
        %240 = vset.pattern.permute.xlu0 2
        %241 = vperm.xlu0 %240, %v186
        %v242 = vpop.permute.xlu0 %241
        %244 = vset.pattern.permute.xlu0 2
        %245 = vperm.xlu0 %244, %v187
        %v246 = vpop.permute.xlu0 %245
        %248 = vset.pattern.permute.xlu0 2
        %249 = vperm.xlu0 %248, %v188
        %v250 = vpop.permute.xlu0 %249
        %252 = vset.pattern.permute.xlu0 2
        %253 = vperm.xlu0 %252, %v189
        %v254 = vpop.permute.xlu0 %253
        %v256 = vperm.slane %v178, 2
        %v257 = vmul.f32 %v242, %v256
        %v258 = vmul.f32 %v246, %v256
        %v259 = vmul.f32 %v250, %v256
        %v260 = vmul.f32 %v254, %v256
        %v261 = vadd.f32 %v236, %v257
        %v262 = vadd.f32 %v237, %v258
        %v263 = vadd.f32 %v238, %v259
        %v264 = vadd.f32 %v239, %v260
        %vm265 = vcmask 261120
        %v266 = vsel %vm265, %v261, 0.0
        %267 = vadd.xlane.f32.xlu0 %v266
        %v268 = vpop.xlane.xlu0 %267
        %v269 = vsel %vm265, %v262, 0.0
        %270 = vadd.xlane.f32.xlu0 %v269
        %v271 = vpop.xlane.xlu0 %270
        %v272 = vsel %vm265, %v263, 0.0
        %273 = vadd.xlane.f32.xlu0 %v272
        %v274 = vpop.xlane.xlu0 %273
        %v275 = vsel %vm265, %v264, 0.0
        %276 = vadd.xlane.f32.xlu0 %v275
        %v277 = vpop.xlane.xlu0 %276
        %v278 = vrcp.pop 32.0
        %v279 = vmul.f32 32.0, %v278
        %v280 = vsub.f32 1.0, %v279
        %v281 = vmul.f32 %v278, %v280
        %v282 = vadd.f32 %v278, %v281
        %vm283 = vweird.f32 %v278
        %v284 = vsel %vm283, %v278, %v282
        %v285 = vmul.f32 %v268, %v284
        %v286 = vmul.f32 %v271, %v284
        %v287 = vmul.f32 %v274, %v284
        %v288 = vmul.f32 %v277, %v284
        %v289 = vsub.f32 %v261, %v285
        %v290 = vsub.f32 %v262, %v286
        %v291 = vsub.f32 %v263, %v287
        %v292 = vsub.f32 %v264, %v288
        %v293 = vmul.f32 %v289, %v289
        %v294 = vmul.f32 %v290, %v290
        %v295 = vmul.f32 %v291, %v291
        %v296 = vmul.f32 %v292, %v292
        %v297 = vsel %vm265, %v293, 0.0
        %298 = vadd.xlane.f32.xlu0 %v297
        %v299 = vpop.xlane.xlu0 %298
        %v300 = vsel %vm265, %v294, 0.0
        %301 = vadd.xlane.f32.xlu0 %v300
        %v302 = vpop.xlane.xlu0 %301
        %v303 = vsel %vm265, %v295, 0.0
        %304 = vadd.xlane.f32.xlu0 %v303
        %v305 = vpop.xlane.xlu0 %304
        %v306 = vsel %vm265, %v296, 0.0
        %307 = vadd.xlane.f32.xlu0 %v306
        %v308 = vpop.xlane.xlu0 %307
        %v309 = vmul.f32 %v299, %v284
        %v310 = vmul.f32 %v302, %v284
        %v311 = vmul.f32 %v305, %v284
        %v312 = vmul.f32 %v308, %v284
        %v313 = vadd.f32 %v309, 1e-05
        %v314 = vadd.f32 %v310, 1e-05
        %v315 = vadd.f32 %v311, 1e-05
        %v316 = vadd.f32 %v312, 1e-05
        %v317 = vrsqrt.pop %v313
        %v318 = vmul.f32 %v317, %v313
        %v319 = vmul.f32 %v318, %v317
        %v320 = vmul.f32 0.5, %v319
        %v321 = vsub.f32 1.5, %v320
        %v322 = vmul.f32 %v317, %v321
        %vm323 = vweird.f32 %v313
        %vm324 = vweird.f32 %v317
        %vm325 = vmor %vm323, %vm324
        %v326 = vsel %vm325, %v317, %v322
        %v327 = vrsqrt.pop %v314
        %v328 = vmul.f32 %v327, %v314
        %v329 = vmul.f32 %v328, %v327
        %v330 = vmul.f32 0.5, %v329
        %v331 = vsub.f32 1.5, %v330
        %v332 = vmul.f32 %v327, %v331
        %vm333 = vweird.f32 %v314
        %vm334 = vweird.f32 %v327
        %vm335 = vmor %vm333, %vm334
        %v336 = vsel %vm335, %v327, %v332
        %v337 = vrsqrt.pop %v315
        %v338 = vmul.f32 %v337, %v315
        %v339 = vmul.f32 %v338, %v337
        %v340 = vmul.f32 0.5, %v339
        %v341 = vsub.f32 1.5, %v340
        %v342 = vmul.f32 %v337, %v341
        %vm343 = vweird.f32 %v315
        %vm344 = vweird.f32 %v337
        %vm345 = vmor %vm343, %vm344
        %v346 = vsel %vm345, %v337, %v342
        %v347 = vrsqrt.pop %v316
        %v348 = vmul.f32 %v347, %v316
        %v349 = vmul.f32 %v348, %v347
        %v350 = vmul.f32 0.5, %v349
        %v351 = vsub.f32 1.5, %v350
        %v352 = vmul.f32 %v347, %v351
        %vm353 = vweird.f32 %v316
        %vm354 = vweird.f32 %v347
        %vm355 = vmor %vm353, %vm354
        %v356 = vsel %vm355, %v347, %v352
        %v357 = vmul.f32 %v289, %v326
        %v358 = vmul.f32 %v290, %v336
        %v359 = vmul.f32 %v291, %v346
        %v360 = vmul.f32 %v292, %v356
        %v361 = vperm.slane %v180, 0
        %v362 = vmul.f32 %v357, %v361
        %v363 = vmul.f32 %v358, %v361
        %v364 = vmul.f32 %v359, %v361
        %v365 = vmul.f32 %v360, %v361
        %v366 = vperm.slane %v181, 0
        %v367 = vadd.f32 %v362, %v366
        %v368 = vadd.f32 %v363, %v366
        %v369 = vadd.f32 %v364, %v366
        %v370 = vadd.f32 %v365, %v366
        %v371 = vpack.c.bf16 %v368, %v367
        %v372 = vpack.c.bf16 %v370, %v369
        %v373 = vpack.c.bf16 %v171, %v170
        %v374 = vpack.c.bf16 %v173, %v172
        %v375 = vperm.slane %v182, 0
        %v377 = vsel %vm265, %v371, 0
        %v380 = vsel %vm265, %v372, 0
        %382 = vmatpush.bf16.msra.mxu0 0
        %383 = vmatpush.bf16.msra.mxu0 0
        %384 = vmatpush.bf16.msra.mxu0 0
        %385 = vmatpush.bf16.msra.mxu0 0
        %386 = vmatpush.bf16.msra.mxu0 0
        %387 = vmatpush.bf16.msra.mxu0 0
        %388 = vmatpush.bf16.msra.mxu0 %v374
        %389 = vmatpush.bf16.msra.mxu0 %v373
        %390 = vmatmul.bf16.gmra.mxu0 %v377
        %v391 = vpop.f32.mrf.mxu0
        %v392 = vadd.f32 %v375, %v391
        %v393 = vpop.f32.mrf.mxu0
        %v394 = vadd.f32 %v375, %v393
        %395 = vmatmul.bf16.gmra.mxu0 %v380
        %v396 = vpop.f32.mrf.mxu0
        %v397 = vadd.f32 %v375, %v396
        %v398 = vpop.f32.mrf.mxu0
        %v399 = vadd.f32 %v375, %v398
        %400 = vdwg.mxu0
        %v401 = vmul.f32 %v392, 0.5
        %v402 = vmul.f32 %v394, 0.5
        %v403 = vmul.f32 %v397, 0.5
        %v404 = vmul.f32 %v399, 0.5
        %v405 = vmul.f32 %v392, 0.044715
        %v406 = vmul.f32 %v394, 0.044715
        %v407 = vmul.f32 %v397, 0.044715
        %v408 = vmul.f32 %v399, 0.044715
        %v409 = vmul.f32 %v405, %v392
        %v410 = vmul.f32 %v406, %v394
        %v411 = vmul.f32 %v407, %v397
        %v412 = vmul.f32 %v408, %v399
        %v413 = vmul.f32 %v409, %v392
        %v414 = vmul.f32 %v410, %v394
        %v415 = vmul.f32 %v411, %v397
        %v416 = vmul.f32 %v412, %v399
        %v417 = vadd.f32 %v392, %v413
        %v418 = vadd.f32 %v394, %v414
        %v419 = vadd.f32 %v397, %v415
        %v420 = vadd.f32 %v399, %v416
        %v421 = vmul.f32 %v417, 0.7978846
        %v422 = vmul.f32 %v418, 0.7978846
        %v423 = vmul.f32 %v419, 0.7978846
        %v424 = vmul.f32 %v420, 0.7978846
        %v425 = vtanh.pop %v421
        %v426 = vtanh.pop %v422
        %v427 = vtanh.pop %v423
        %v428 = vtanh.pop %v424
        %v429 = vadd.f32 %v425, 1.0
        %v430 = vadd.f32 %v426, 1.0
        %v431 = vadd.f32 %v427, 1.0
        %v432 = vadd.f32 %v428, 1.0
        %v433 = vmul.f32 %v401, %v429
        %v434 = vmul.f32 %v402, %v430
        %v435 = vmul.f32 %v403, %v431
        %v436 = vmul.f32 %v404, %v432
        %v437 = vpack.c.bf16 %v434, %v433
        %v438 = vpack.c.bf16 %v436, %v435
        %v439 = vpack.c.bf16 %v175, %v174
        %v440 = vpack.c.bf16 %v177, %v176
        %v441 = vperm.slane %v183, 0
        %v443 = vsel %vm265, %v437, 0
        %v446 = vsel %vm265, %v438, 0
        %448 = vmatpush.bf16.msra.mxu0 0
        %449 = vmatpush.bf16.msra.mxu0 0
        %450 = vmatpush.bf16.msra.mxu0 0
        %451 = vmatpush.bf16.msra.mxu0 0
        %452 = vmatpush.bf16.msra.mxu0 0
        %453 = vmatpush.bf16.msra.mxu0 0
        %454 = vmatpush.bf16.msra.mxu0 %v440
        %455 = vmatpush.bf16.msra.mxu0 %v439
        %456 = vmatmul.bf16.gmra.mxu0 %v443
        %v457 = vpop.f32.mrf.mxu0
        %v458 = vadd.f32 %v441, %v457
        %v459 = vpop.f32.mrf.mxu0
        %v460 = vadd.f32 %v441, %v459
        %461 = vmatmul.bf16.gmra.mxu0 %v446
        %v462 = vpop.f32.mrf.mxu0
        %v463 = vadd.f32 %v441, %v462
        %v464 = vpop.f32.mrf.mxu0
        %v465 = vadd.f32 %v441, %v464
        %466 = vdwg.mxu0
        %v467 = vadd.f32 %v261, %v458
        %v468 = vadd.f32 %v262, %v460
        %v469 = vadd.f32 %v263, %v463
        %v470 = vadd.f32 %v264, %v465
        %471 = vst.msk [vmem:[#allocation2] sm:$0xff] %vm265, %v467
        %472 = vst.msk [vmem:[#allocation2 + $0x8] sm:$0xff] %vm265, %v468
        %473 = vst.msk [vmem:[#allocation2 + $0x10] sm:$0xff] %vm265, %v469
        %474 = vst.msk [vmem:[#allocation2 + $0x18] sm:$0xff] %vm265, %v470
        %v475 = vld [vmem:[#allocation2] sm:$0xff]
        %476 = vst.msk [vmem:[#allocation3] sm:$0xff] %vm265, %v475
        %v477 = vld [vmem:[#allocation2 + $0x8] sm:$0xff]
        %479 = vrot.lane.b32.xlu0 %v477, 32
        %v480 = vpop.permute.xlu0 %479
        %vm482 = vcmask 523520
        %483 = vst.msk [vmem:[#allocation3] sm:$0xff] %vm482, %v480
        %v484 = vld [vmem:[#allocation2 + $0x10] sm:$0xff]
        %486 = vrot.lane.b32.xlu0 %v484, 64
        %v487 = vpop.permute.xlu0 %486
        %vm489 = vcmask 785920
        %490 = vst.msk [vmem:[#allocation3] sm:$0xff] %vm489, %v487
        %v491 = vld [vmem:[#allocation2 + $0x18] sm:$0xff]
        %493 = vrot.lane.b32.xlu0 %v491, 96
        %v494 = vpop.permute.xlu0 %493
        %vm496 = vcmask 1048320
        %497 = vst.msk [vmem:[#allocation3] sm:$0xff] %vm496, %v494
        %v498 = vld [vmem:[#allocation3] sm:$0xff]
        %v499 = vrot.slane %v498, 4
        %v500 = vadd.f32 %v498, %v499
        %v501 = vrot.slane %v500, 2
        %v502 = vadd.f32 %v500, %v501
        %v503 = vrot.slane %v502, 1
        %v504 = vadd.f32 %v502, %v503
        %v505 = vrcp.pop 8.0
        %v506 = vmul.f32 8.0, %v505
        %v507 = vsub.f32 1.0, %v506
        %v508 = vmul.f32 %v505, %v507
        %v509 = vadd.f32 %v505, %v508
        %vm510 = vweird.f32 %v505
        %v511 = vsel %vm510, %v505, %v509
        %v512 = vmul.f32 %v504, %v511
        %v513 = vsub.f32 %v498, %v512
        %v514 = vmul.f32 %v513, %v513
        %v515 = vrot.slane %v514, 4
        %v516 = vadd.f32 %v514, %v515
        %v517 = vrot.slane %v516, 2
        %v518 = vadd.f32 %v516, %v517
        %v519 = vrot.slane %v518, 1
        %v520 = vadd.f32 %v518, %v519
        %v521 = vmul.f32 %v520, %v511
        %v522 = vadd.f32 %v521, 1e-05
        %v523 = vrsqrt.pop %v522
        %v524 = vmul.f32 %v523, %v522
        %v525 = vmul.f32 %v524, %v523
        %v526 = vmul.f32 0.5, %v525
        %v527 = vsub.f32 1.5, %v526
        %v528 = vmul.f32 %v523, %v527
        %vm529 = vweird.f32 %v522
        %vm530 = vweird.f32 %v523
        %vm531 = vmor %vm529, %vm530
        %v532 = vsel %vm531, %v523, %v528
        %v533 = vmul.f32 %v513, %v532
        %535 = vset.pattern.permute.xlu0 16
        %536 = vperm.xlu0 %535, %v184
        %v537 = vpop.permute.xlu0 %536
        %v539 = vmul.f32 %v533, %v537
        %540 = vset.pattern.permute.xlu0 17
        %541 = vperm.xlu0 %540, %v184
        %v542 = vpop.permute.xlu0 %541
        %v544 = vadd.f32 %v539, %v542
        %v545 = vpack.c.bf16 %v184, %v184
        %v546 = vpack.c.bf16 %v544, %v544
        %547 = vset.pattern.permute.xlu0 18
        %548 = vperm.xlu0 %547, %v184
        %v549 = vpop.permute.xlu0 %548
        %vm551 = vcmask 64512
        %v553 = vsel %vm551, %v545, 0
        %vm555 = vcmask 1043456
        %v557 = vsel %vm555, %v546, 0
        %559 = vmatpush.bf16.msra.mxu0 0
        %560 = vmatpush.bf16.msra.mxu0 0
        %561 = vmatpush.bf16.msra.mxu0 0
        %562 = vmatpush.bf16.msra.mxu0 0
        %563 = vmatpush.bf16.msra.mxu0 0
        %564 = vmatpush.bf16.msra.mxu0 0
        %565 = vmatpush.bf16.msra.mxu0 0
        %566 = vmatpush.bf16.msra.mxu0 %v557
        %567 = vmatmul.bf16.gmra.mxu0 %v553
        %v568 = vpop.f32.mrf.mxu0
        %v569 = vadd.f32 %v549, %v568
        %v570 = vpop.f32.mrf.mxu0
        %571 = vdwg.mxu0
        %v572 = vmul.f32 %v569, 0.5
        %v573 = vmul.f32 %v569, 0.044715
        %v574 = vmul.f32 %v573, %v569
        %v575 = vmul.f32 %v574, %v569
        %v576 = vadd.f32 %v569, %v575
        %v577 = vmul.f32 %v576, 0.7978846
        %v578 = vtanh.pop %v577
        %v579 = vadd.f32 %v578, 1.0
        %v580 = vmul.f32 %v572, %v579
        %v581 = vpack.c.bf16 %v580, %v580
        %582 = vset.pattern.permute.xlu0 19
        %583 = vperm.xlu0 %582, %v184
        %v584 = vpop.permute.xlu0 %583
        %587 = vrot.lane.b32.xlu0 %v545, 120
        %v588 = vpop.permute.xlu0 %587
        %v590 = vsel %vm551, %v588, 0
        %v593 = vsel %vm555, %v581, 0
        %595 = vmatpush.bf16.msra.mxu0 0
        %596 = vmatpush.bf16.msra.mxu0 0
        %597 = vmatpush.bf16.msra.mxu0 0
        %598 = vmatpush.bf16.msra.mxu0 0
        %599 = vmatpush.bf16.msra.mxu0 0
        %600 = vmatpush.bf16.msra.mxu0 0
        %601 = vmatpush.bf16.msra.mxu0 0
        %602 = vmatpush.bf16.msra.mxu0 %v593
        %603 = vmatmul.bf16.gmra.mxu0 %v590
        %v604 = vpop.f32.mrf.mxu0
        %v605 = vadd.f32 %v584, %v604
        %v606 = vpop.f32.mrf.mxu0
        %607 = vdwg.mxu0
        %v608 = vadd.f32 %v498, %v605
        %609 = vst.msk [vmem:[#allocation4] sm:$0xff] %vm265, %v608
        %611 = vrot.lane.b32.xlu0 %v608, 96
        %v612 = vpop.permute.xlu0 %611
        %614 = vst.msk [vmem:[#allocation4 + $0x8] sm:$0xff] %vm265, %v612
        %615 = vrot.lane.b32.xlu0 %v608, 64
        %v616 = vpop.permute.xlu0 %615
        %618 = vst.msk [vmem:[#allocation4 + $0x10] sm:$0xff] %vm265, %v616
        %619 = vrot.lane.b32.xlu0 %v608, 32
        %v620 = vpop.permute.xlu0 %619
        %622 = vst.msk [vmem:[#allocation4 + $0x18] sm:$0xff] %vm265, %v620
        %v623 = vld [vmem:[#allocation4] ss:$8 sm:$0xf]
        %vm624 = vcmask 257024
        %625 = vst.msk [vmem:[#allocation5] sm:$0xf] %vm624, %v623
        %s626 = scalar_lea.vmem [#allocation4], 1
        %v627 = vld [vmem:[%s626] ss:$8 sm:$0xf]
        %629 = vrot.lane.b32.xlu0 %v627, 32
        %v630 = vpop.permute.xlu0 %629
        %vm632 = vcmask 519424
        %633 = vst.msk [vmem:[#allocation5] sm:$0xf] %vm632, %v630
        %s634 = scalar_lea.vmem [#allocation4], 2
        %v635 = vld [vmem:[%s634] ss:$8 sm:$0xf]
        %637 = vrot.lane.b32.xlu0 %v635, 64
        %v638 = vpop.permute.xlu0 %637
        %vm640 = vcmask 781824
        %641 = vst.msk [vmem:[#allocation5] sm:$0xf] %vm640, %v638
        %s642 = scalar_lea.vmem [#allocation4], 3
        %v643 = vld [vmem:[%s642] ss:$8 sm:$0xf]
        %645 = vrot.lane.b32.xlu0 %v643, 96
        %v646 = vpop.permute.xlu0 %645
        %vm648 = vcmask 1044224
        %649 = vst.msk [vmem:[#allocation5] sm:$0xf] %vm648, %v646
        %s650 = scalar_lea.vmem [#allocation4], 4
        %v651 = vld [vmem:[%s650] ss:$8 sm:$0xf]
        %652 = vst.msk [vmem:[#allocation5 + $0x4] sm:$0xf] %vm624, %v651
        %s653 = scalar_lea.vmem [#allocation4], 5
        %v654 = vld [vmem:[%s653] ss:$8 sm:$0xf]
        %656 = vrot.lane.b32.xlu0 %v654, 32
        %v657 = vpop.permute.xlu0 %656
        %659 = vst.msk [vmem:[#allocation5 + $0x4] sm:$0xf] %vm632, %v657
        %s660 = scalar_lea.vmem [#allocation4], 6
        %v661 = vld [vmem:[%s660] ss:$8 sm:$0xf]
        %663 = vrot.lane.b32.xlu0 %v661, 64
        %v664 = vpop.permute.xlu0 %663
        %666 = vst.msk [vmem:[#allocation5 + $0x4] sm:$0xf] %vm640, %v664
        %s667 = scalar_lea.vmem [#allocation4], 7
        %v668 = vld [vmem:[%s667] ss:$8 sm:$0xf]
        %670 = vrot.lane.b32.xlu0 %v668, 96
        %v671 = vpop.permute.xlu0 %670
        %673 = vst.msk [vmem:[#allocation5 + $0x4] sm:$0xf] %vm648, %v671
        %v674 = vld [vmem:[#allocation5] sm:$0xff]
        %676 = vst [vmem:[#allocation1] ss:$2 sm:$0xff] %v674
        %v677 = vld.sshfl [vmem:[#allocation1] sm:$0xff pattern:$0x75316420]
        %v678 = vld.sshfl [vmem:[#allocation1 + $0x8] sm:$0xff pattern:$0x75316420]
        %v681 = vsel %vm555, %v677, 0.0
        %v682 = vrot.slane %v681, 4
        %v683 = vadd.f32 %v681, %v682
        %v684 = vrot.slane %v683, 2
        %v685 = vadd.f32 %v683, %v684
        %v686 = vrot.slane %v685, 1
        %v687 = vadd.f32 %v685, %v686
        %v688 = vsel %vm555, %v678, 0.0
        %v689 = vrot.slane %v688, 4
        %v690 = vadd.f32 %v688, %v689
        %v691 = vrot.slane %v690, 2
        %v692 = vadd.f32 %v690, %v691
        %v693 = vrot.slane %v692, 1
        %v694 = vadd.f32 %v692, %v693
        %v695 = vrcp.pop 4.0
        %v696 = vmul.f32 4.0, %v695
        %v697 = vsub.f32 1.0, %v696
        %v698 = vmul.f32 %v695, %v697
        %v699 = vadd.f32 %v695, %v698
        %vm700 = vweird.f32 %v695
        %v701 = vsel %vm700, %v695, %v699
        %v702 = vmul.f32 %v687, %v701
        %v703 = vmul.f32 %v694, %v701
        %v706 = vrot.slane %v703, 4
        %v707 = vsel %vm555, %v702, %v706
        %v709 = vsub.f32 %v674, %v707
        %v710 = vmul.f32 %v709, %v709
        %712 = vst [vmem:[#allocation1] ss:$2 sm:$0xff] %v710
        %v713 = vld.sshfl [vmem:[#allocation1] sm:$0xff pattern:$0x75316420]
        %v714 = vld.sshfl [vmem:[#allocation1 + $0x8] sm:$0xff pattern:$0x75316420]
        %v717 = vsel %vm555, %v713, 0.0
        %v718 = vrot.slane %v717, 4
        %v719 = vadd.f32 %v717, %v718
        %v720 = vrot.slane %v719, 2
        %v721 = vadd.f32 %v719, %v720
        %v722 = vrot.slane %v721, 1
        %v723 = vadd.f32 %v721, %v722
        %v724 = vsel %vm555, %v714, 0.0
        %v725 = vrot.slane %v724, 4
        %v726 = vadd.f32 %v724, %v725
        %v727 = vrot.slane %v726, 2
        %v728 = vadd.f32 %v726, %v727
        %v729 = vrot.slane %v728, 1
        %v730 = vadd.f32 %v728, %v729
        %v731 = vmul.f32 %v723, %v701
        %v732 = vmul.f32 %v730, %v701
        %v733 = vadd.f32 %v731, 1e-05
        %v734 = vadd.f32 %v732, 1e-05
        %v735 = vrsqrt.pop %v733
        %v736 = vmul.f32 %v735, %v733
        %v737 = vmul.f32 %v736, %v735
        %v738 = vmul.f32 0.5, %v737
        %v739 = vsub.f32 1.5, %v738
        %v740 = vmul.f32 %v735, %v739
        %vm741 = vweird.f32 %v733
        %vm742 = vweird.f32 %v735
        %vm743 = vmor %vm741, %vm742
        %v744 = vsel %vm743, %v735, %v740
        %v745 = vrsqrt.pop %v734
        %v746 = vmul.f32 %v745, %v734
        %v747 = vmul.f32 %v746, %v745
        %v748 = vmul.f32 0.5, %v747
        %v749 = vsub.f32 1.5, %v748
        %v750 = vmul.f32 %v745, %v749
        %vm751 = vweird.f32 %v734
        %vm752 = vweird.f32 %v745
        %vm753 = vmor %vm751, %vm752
        %v754 = vsel %vm753, %v745, %v750
        %v757 = vrot.slane %v754, 4
        %v758 = vsel %vm555, %v744, %v757
        %v760 = vmul.f32 %v709, %v758
        %762 = vset.pattern.permute.xlu0 28
        %763 = vperm.xlu0 %762, %v185
        %v764 = vpop.permute.xlu0 %763
        %v766 = vunpack.c.l.s4 839922192
        %v767 = vunpack.c.0.s8 %v766
        %v768 = vperm.slane %v764, %v767
        %v770 = vmul.f32 %v760, %v768
        %771 = vset.pattern.permute.xlu0 29
        %772 = vperm.xlu0 %771, %v185
        %v773 = vpop.permute.xlu0 %772
        %v775 = vunpack.c.l.s4 839922192
        %v776 = vunpack.c.0.s8 %v775
        %v777 = vperm.slane %v773, %v776
        %v779 = vadd.f32 %v770, %v777
        %v780 = vpack.c.bf16 %v185, %v185
        %782 = vst [vmem:[#allocation1] ss:$2 sm:$0xff] %v779
        %v783 = vld.sshfl [vmem:[#allocation1] sm:$0xff pattern:$0x75316420]
        %v784 = vld.sshfl [vmem:[#allocation1 + $0x8] sm:$0xff pattern:$0x75316420]
        %v787 = vpack.c.bf16 %v783, %v783
        %v788 = vpack.c.bf16 %v784, %v784
        %789 = vset.pattern.permute.xlu0 30
        %790 = vperm.xlu0 %789, %v185
        %v791 = vpop.permute.xlu0 %790
        %794 = vrot.lane.b32.xlu0 %v780, 108
        %v795 = vpop.permute.xlu0 %794
        %vm796 = vcmask 31744
        %v798 = vsel %vm796, %v795, 0
        %vm800 = vcmask 1041408
        %v802 = vsel %vm800, %v787, 0
        %v805 = vsel %vm800, %v788, 0
        %807 = vmatpush.bf16.msra.mxu0 0
        %808 = vmatpush.bf16.msra.mxu0 0
        %809 = vmatpush.bf16.msra.mxu0 0
        %810 = vmatpush.bf16.msra.mxu0 0
        %811 = vmatpush.bf16.msra.mxu0 0
        %812 = vmatpush.bf16.msra.mxu0 0
        %813 = vmatpush.bf16.msra.mxu0 0
        %814 = vmatpush.bf16.msra.mxu0 %v802
        %815 = vmatmul.bf16.gmra.mxu0 %v798
        %v816 = vpop.f32.mrf.mxu0
        %v817 = vadd.f32 %v791, %v816
        %v818 = vpop.f32.mrf.mxu0
        %819 = vdwg.mxu0
        %820 = vmatpush.bf16.msra.mxu0 0
        %821 = vmatpush.bf16.msra.mxu0 0
        %822 = vmatpush.bf16.msra.mxu0 0
        %823 = vmatpush.bf16.msra.mxu0 0
        %824 = vmatpush.bf16.msra.mxu0 0
        %825 = vmatpush.bf16.msra.mxu0 0
        %826 = vmatpush.bf16.msra.mxu0 0
        %827 = vmatpush.bf16.msra.mxu0 %v805
        %828 = vmatmul.bf16.gmra.mxu0 %v798
        %v829 = vpop.f32.mrf.mxu0
        %v830 = vadd.f32 %v791, %v829
        %v831 = vpop.f32.mrf.mxu0
        %832 = vdwg.mxu0
        %v833 = vmul.f32 %v817, 0.5
        %v834 = vmul.f32 %v830, 0.5
        %v835 = vmul.f32 %v817, 0.044715
        %v836 = vmul.f32 %v830, 0.044715
        %v837 = vmul.f32 %v835, %v817
        %v838 = vmul.f32 %v836, %v830
        %v839 = vmul.f32 %v837, %v817
        %v840 = vmul.f32 %v838, %v830
        %v841 = vadd.f32 %v817, %v839
        %v842 = vadd.f32 %v830, %v840
        %v843 = vmul.f32 %v841, 0.7978846
        %v844 = vmul.f32 %v842, 0.7978846
        %v845 = vtanh.pop %v843
        %v846 = vtanh.pop %v844
        %v847 = vadd.f32 %v845, 1.0
        %v848 = vadd.f32 %v846, 1.0
        %v849 = vmul.f32 %v833, %v847
        %v850 = vmul.f32 %v834, %v848
        %v851 = vpack.c.bf16 %v849, %v849
        %v852 = vpack.c.bf16 %v850, %v850
        %853 = vset.pattern.permute.xlu0 31
        %854 = vperm.xlu0 %853, %v185
        %v855 = vpop.permute.xlu0 %854
        %857 = vrot.lane.b32.xlu0 %v780, 104
        %v858 = vpop.permute.xlu0 %857
        %v860 = vsel %vm796, %v858, 0
        %v863 = vsel %vm800, %v851, 0
        %v866 = vsel %vm800, %v852, 0
        %868 = vmatpush.bf16.msra.mxu0 0
        %869 = vmatpush.bf16.msra.mxu0 0
        %870 = vmatpush.bf16.msra.mxu0 0
        %871 = vmatpush.bf16.msra.mxu0 0
        %872 = vmatpush.bf16.msra.mxu0 0
        %873 = vmatpush.bf16.msra.mxu0 0
        %874 = vmatpush.bf16.msra.mxu0 0
        %875 = vmatpush.bf16.msra.mxu0 %v863
        %876 = vmatmul.bf16.gmra.mxu0 %v860
        %v877 = vpop.f32.mrf.mxu0
        %v878 = vadd.f32 %v855, %v877
        %v879 = vpop.f32.mrf.mxu0
        %880 = vdwg.mxu0
        %881 = vmatpush.bf16.msra.mxu0 0
        %882 = vmatpush.bf16.msra.mxu0 0
        %883 = vmatpush.bf16.msra.mxu0 0
        %884 = vmatpush.bf16.msra.mxu0 0
        %885 = vmatpush.bf16.msra.mxu0 0
        %886 = vmatpush.bf16.msra.mxu0 0
        %887 = vmatpush.bf16.msra.mxu0 0
        %888 = vmatpush.bf16.msra.mxu0 %v866
        %889 = vmatmul.bf16.gmra.mxu0 %v860
        %v890 = vpop.f32.mrf.mxu0
        %v891 = vadd.f32 %v855, %v890
        %v892 = vpop.f32.mrf.mxu0
        %893 = vdwg.mxu0
        %v896 = vrot.slane %v891, 4
        %v897 = vsel %vm555, %v878, %v896
        %v899 = vadd.f32 %v674, %v897
        %900 = vst.msk [vmem:[#allocation6] sm:$0xf] %vm624, %v899
        %902 = vst [vmem:[#allocation1] ss:$2 sm:$0xff] %v899
        %v903 = vld.sshfl [vmem:[#allocation1] sm:$0xff pattern:$0x75316420]
        %904 = vrot.lane.b32.xlu0 %v903, 96
        %v905 = vpop.permute.xlu0 %904
        %907 = vst.msk [vmem:[#allocation6 + $0x4] sm:$0xf] %vm624, %v905
        %908 = vst [vmem:[#allocation1] ss:$2 sm:$0xff] %v899
        %v909 = vld.sshfl [vmem:[#allocation1] sm:$0xff pattern:$0x75316420]
        %910 = vrot.lane.b32.xlu0 %v909, 64
        %v911 = vpop.permute.xlu0 %910
        %913 = vst.msk [vmem:[#allocation6 + $0x8] sm:$0xf] %vm624, %v911
        %914 = vst [vmem:[#allocation1] ss:$2 sm:$0xff] %v899
        %v915 = vld.sshfl [vmem:[#allocation1] sm:$0xff pattern:$0x75316420]
        %916 = vrot.lane.b32.xlu0 %v915, 32
        %v917 = vpop.permute.xlu0 %916
        %919 = vst.msk [vmem:[#allocation6 + $0xc] sm:$0xf] %vm624, %v917
        %920 = vst [vmem:[#allocation1] ss:$2 sm:$0xff] %v899
        %v921 = vld.sshfl [vmem:[#allocation1 + $0x8] sm:$0xff pattern:$0x75316420]
        %923 = vst.msk [vmem:[#allocation6 + $0x10] sm:$0xf] %vm624, %v921
        %924 = vst [vmem:[#allocation1] ss:$2 sm:$0xff] %v899
        %v925 = vld.sshfl [vmem:[#allocation1 + $0x8] sm:$0xff pattern:$0x75316420]
        %926 = vrot.lane.b32.xlu0 %v925, 96
        %v927 = vpop.permute.xlu0 %926
        %929 = vst.msk [vmem:[#allocation6 + $0x14] sm:$0xf] %vm624, %v927
        %930 = vst [vmem:[#allocation1] ss:$2 sm:$0xff] %v899
        %v931 = vld.sshfl [vmem:[#allocation1 + $0x8] sm:$0xff pattern:$0x75316420]
        %932 = vrot.lane.b32.xlu0 %v931, 64
        %v933 = vpop.permute.xlu0 %932
        %935 = vst.msk [vmem:[#allocation6 + $0x18] sm:$0xf] %vm624, %v933
        %936 = vst [vmem:[#allocation1] ss:$2 sm:$0xff] %v899
        %v937 = vld.sshfl [vmem:[#allocation1 + $0x8] sm:$0xff pattern:$0x75316420]
        %938 = vrot.lane.b32.xlu0 %v937, 32
        %v939 = vpop.permute.xlu0 %938
        %941 = vst.msk [vmem:[#allocation6 + $0x1c] sm:$0xf] %vm624, %v939
        %v942 = vpack.c.bf16 %v179, %v179
        %v943 = vld [vmem:[#allocation6] sm:$0xff]
        %v944 = vld [vmem:[#allocation6 + $0x8] sm:$0xff]
        %v945 = vld [vmem:[#allocation6 + $0x10] sm:$0xff]
        %v946 = vld [vmem:[#allocation6 + $0x18] sm:$0xff]
        %v947 = vpack.c.bf16 %v944, %v943
        %v948 = vpack.c.bf16 %v946, %v945
        %v950 = vsel %vm265, %v942, 0
        %v953 = vsel %vm265, %v947, 0
        %v956 = vsel %vm265, %v948, 0
        %958 = vmatpush.bf16.xpose.msra.mxu0 0
        %959 = vmatpush.bf16.xpose.msra.mxu0 0
        %960 = vmatpush.bf16.xpose.msra.mxu0 0
        %961 = vmatpush.bf16.xpose.msra.mxu0 0
        %962 = vmatpush.bf16.xpose.msra.mxu0 0
        %963 = vmatpush.bf16.xpose.msra.mxu0 0
        %964 = vmatpush.bf16.xpose.msra.mxu0 %v956
        %965 = vmatpush.bf16.xpose.msra.mxu0 %v953
        %966 = vmatmul.bf16.gmra.mxu0 %v950
        %v967 = vpop.f32.mrf.mxu0
        %v968 = vadd.f32 0.0, %v967
        %v969 = vpop.f32.mrf.mxu0
        %970 = vdwg.mxu0
        %vm971 = vcmask 254976
        %972 = vst.msk [vmem:[%s163] sm:$0x3] %vm971, %v968
        %s973 = sand.u32 %s93, 1
        %s974 = scalar_lea.sflag [#allocation8], %s973
        %s975 = sand.u32 %s93, 1
        %s976 = smul.addr %s975, 2
        %s977 = scalar_lea.vmem [#allocation7], %s976
        // Predicated region
        $region33: #{tpu_custom_call.1} parent=31 // pred_check
          %p978 = pneg %p103
        $region34: #{tpu_custom_call.1} parent=31 // pred_check_branch
          %980 = sbr.rel (%p978) target = $region36
        $region35: #{tpu_custom_call.1} parent=31 // pred_region
          %982 = vsyncadd %s974, 0
          %s983 = smul.addr %s17, 2
          %s984 = scalar_lea.hbm %s3, %s983
          %s986 = sshll.u32 %s977, 4
          %s987 = int_to_ptr.vmem [resolvable:$true] %s986
          %s988 = sshll.u32 %s984, 4
          %s989 = int_to_ptr.hbm [resolvable:$true] %s988
          %991 = dma.vmem_to_hbm [thread:$0]  %s987, 32, %s989, %s974
        $region36: #{tpu_custom_call.1} parent=31 // pred_fallthru
          _
      $region32: #{tpu_custom_call.1} parent=5 // pred_fallthru
        _
      %p992 = scmp.le.s32.totalorder 2, %s12
      // Predicated region
      $region37: #{tpu_custom_call.1} parent=5 // pred_check
        %p993 = pneg %p992
      $region38: #{tpu_custom_call.1} parent=5 // pred_check_branch
        %995 = sbr.rel (%p993) target = $region40
      $region39: #{tpu_custom_call.1} parent=5 // pred_region
        %s996 = ssub.s32 %s12, 2
        // Predicated region
        $region41: #{tpu_custom_call.1} parent=39 // pred_check
          %p997 = pneg %p109
        $region42: #{tpu_custom_call.1} parent=39 // pred_check_branch
          %999 = sbr.rel (%p997) target = $region44
        $region43: #{tpu_custom_call.1} parent=39 // pred_region
          %s1000 = sand.u32 %s94, 1
          %s1001 = scalar_lea.sflag [#allocation8], %s1000
          %s1002 = sand.u32 %s94, 1
          %s1003 = smul.addr %s1002, 2
          %s1004 = scalar_lea.vmem [#allocation7], %s1003
          %1006 = dma.done %s1001, 32
        $region44: #{tpu_custom_call.1} parent=39 // pred_fallthru
          _
      $region40: #{tpu_custom_call.1} parent=5 // pred_fallthru
        _
    $region6: #{tpu_custom_call.1} parent=1 // loop_footer
      %s16 = sadd.s32 1, %s12
    $region7: #{tpu_custom_call.1} parent=1 // loop_footer_branch
      %11 = sbr.rel target = $region3
    $region8: #{tpu_custom_call.1} parent=1 // loop_exit
      _
    %1007 = vsyncpa [#allocation8], 1
    %s1008 = scalar_lea.sflag [#allocation8], 1
    %1009 = vsyncpa %s1008, 1

</llo_original>
